<compile_context>
chip_gen: v7x
topology: tpu7x:2x2x1
jax: 0.10.0
libtpu: 0.0.40
codegen_flags: <defaults>
</compile_context>

<pallas_src>
import jax
import jax.numpy as jnp
from jax import lax
from jax.experimental import pallas as pl
from jax.experimental.pallas import tpu as pltpu


def make_mha_kernel(seq_len, d_model, num_heads, approx_recip=True):
    head_dim = d_model // num_heads

    def mha_kernel(x_ref, wq_ref, wk_ref, wv_ref, bq_ref, bk_ref, bv_ref,
                   wout_ref, bout_ref, o_ref):
        # x_ref:    (1, S, D)  current batch element
        # wq/k/v:   (D, D)     full projection weights (in x out), head-major cols
        #                      (Wq / bq already carry the 1/sqrt(hd) scale)
        # bq/k/v:   (1, D)     f32 biases
        # wout_ref: (D, D)     W_out^T (rows head-major, matching the concat order)
        # bout_ref: (1, D)     f32 output bias
        # o_ref:    (1, S, D)
        x = x_ref[0]                       # (S, D)
        cdt = x.dtype                      # MXU operand dtype (bf16 in prod)

        # --- full-width projections: lane-dense MXU matmuls, f32 accumulation ---
        q = (jnp.dot(x, wq_ref[...], preferred_element_type=jnp.float32)
             + bq_ref[...]).astype(cdt)                                  # (S, D), pre-scaled
        k = (jnp.dot(x, wk_ref[...], preferred_element_type=jnp.float32)
             + bk_ref[...]).astype(cdt)                                  # (S, D)
        v = (jnp.dot(x, wv_ref[...], preferred_element_type=jnp.float32)
             + bv_ref[...]).astype(cdt)                                  # (S, D)

        head_outs = []
        for h in range(num_heads):         # static unroll; per-head temps die each iter
            lo = h * head_dim
            qh = q[:, lo:lo + head_dim]    # (S, hd)
            kh = k[:, lo:lo + head_dim]
            vh = v[:, lo:lo + head_dim]

            # scores = q_h @ k_h^T (scale already folded into Wq/bq)
            s = lax.dot_general(
                qh, kh, dimension_numbers=(((1,), (1,)), ((), ())),
                preferred_element_type=jnp.float32)                      # (S, S) f32

            # softmax with deferred normalization (f32 max/exp/sum)
            m = jnp.max(s, axis=-1, keepdims=True)
            p = jnp.exp(s - m)                                           # (S, S) f32, in [0,1]
            denom = jnp.sum(p, axis=-1, keepdims=True)                   # (S, 1) f32
            if approx_recip:
                inv = pl.reciprocal(denom, approx=True)                  # EUP slot
            else:
                inv = 1.0 / denom
            # TODO(synk): attention dropout skipped (eval-mode identity).

            attn = jnp.dot(p.astype(cdt), vh,
                           preferred_element_type=jnp.float32)           # (S, hd) f32
            head_outs.append((attn * inv).astype(cdt))                   # normalize on (S, hd)

        attn_all = jnp.concatenate(head_outs, axis=-1)                   # (S, D), head-major

        out = (jnp.dot(attn_all, wout_ref[...],
                       preferred_element_type=jnp.float32)
               + bout_ref[...])                                          # (S, D) f32
        # TODO(synk): output dropout skipped (eval-mode identity).
        o_ref[0] = out.astype(o_ref.dtype)

    return mha_kernel


def prepare_mha_params(w_qkv, b_qkv, w_out, b_out, num_heads, dtype=None):
    """One-time weight re-layout (hoisted out of the per-call path).

    PyTorch nn.Linear stores (out_features, in_features).  We transpose to
    (in, out) so the kernel runs plain (S,D)@(D,D) matmuls; the qkv output
    columns are already head-major (matching PyTorch's reshape to (3,H,hd)),
    and W_out^T rows are head-major, matching the in-kernel concat order.
    The 1/sqrt(head_dim) scale is folded into Wq / bq here."""
    D = w_qkv.shape[1]
    hd = D // num_heads
    scale = hd ** (-0.5)
    if dtype is None:
        dtype = w_qkv.dtype

    wq = (jnp.transpose(w_qkv[0 * D:1 * D]) * scale).astype(dtype)   # (D, D), scaled
    wk = jnp.transpose(w_qkv[1 * D:2 * D]).astype(dtype)             # (D, D)
    wv = jnp.transpose(w_qkv[2 * D:3 * D]).astype(dtype)             # (D, D)

    bq = (b_qkv[0 * D:1 * D] * scale).reshape(1, D).astype(jnp.float32)
    bk = b_qkv[1 * D:2 * D].reshape(1, D).astype(jnp.float32)
    bv = b_qkv[2 * D:3 * D].reshape(1, D).astype(jnp.float32)

    wout = jnp.transpose(w_out).astype(dtype)                         # (D, D) = W_out^T
    bout = b_out.reshape(1, D).astype(jnp.float32)
    return (wq, wk, wv, bq, bk, bv, wout, bout)


def _vmem_limit_bytes(S, D, x_itemsize, w_itemsize):
    """Rough per-step live-set estimate with headroom, clamped to a budget that
    is safe on v5e/v6e (128 MiB phys) and v7x (64 MiB phys)."""
    weights = 4 * D * D * w_itemsize + 4 * D * 4                      # W + f32 biases
    io = 2 * S * D * x_itemsize + 2 * S * D * x_itemsize              # x + out (double-buffered)
    temps = 4 * S * D * 4 + 3 * S * S * 4                             # q/k/v/attn_all + scores/p
    est = 2 * (weights + io + temps)
    return int(min(max(est, 32 * 1024 * 1024), 64 * 1024 * 1024))


def multi_head_attention(x, params, num_heads, *, approx_softmax_recip=True):
    """x: (B, S, D); params from prepare_mha_params."""
    B, S, D = x.shape
    wq, wk, wv, bq, bk, bv, wout, bout = params

    kernel = make_mha_kernel(S, D, num_heads, approx_recip=approx_softmax_recip)

    flops = B * (8 * S * D * D + 4 * S * S * D)            # proj + attn + out-proj
    transcendentals = B * num_heads * S * S                 # exp
    w_bytes = ((wq.size + wk.size + wv.size + wout.size) * wq.dtype.itemsize
               + (bq.size + bk.size + bv.size + bout.size) * 4)
    # weights are VMEM-resident across the call: count them once, not x B
    bytes_accessed = 2 * x.size * x.dtype.itemsize + w_bytes

    return pl.pallas_call(
        kernel,
        out_shape=jax.ShapeDtypeStruct((B, S, D), x.dtype),
        grid_spec=pltpu.PrefetchScalarGridSpec(
            num_scalar_prefetch=0,
            grid=(B,),
            in_specs=[
                pl.BlockSpec((1, S, D), lambda b: (b, 0, 0)),   # x (per batch elem)
                pl.BlockSpec((D, D), lambda b: (0, 0)),         # Wq (resident)
                pl.BlockSpec((D, D), lambda b: (0, 0)),         # Wk (resident)
                pl.BlockSpec((D, D), lambda b: (0, 0)),         # Wv (resident)
                pl.BlockSpec((1, D), lambda b: (0, 0)),         # bq
                pl.BlockSpec((1, D), lambda b: (0, 0)),         # bk
                pl.BlockSpec((1, D), lambda b: (0, 0)),         # bv
                pl.BlockSpec((D, D), lambda b: (0, 0)),         # W_out^T (resident)
                pl.BlockSpec((1, D), lambda b: (0, 0)),         # b_out
            ],
            out_specs=pl.BlockSpec((1, S, D), lambda b: (b, 0, 0)),
        ),
        compiler_params=pltpu.CompilerParams(
            dimension_semantics=("parallel",),
            vmem_limit_bytes=_vmem_limit_bytes(S, D, x.dtype.itemsize,
                                               wq.dtype.itemsize)),
        cost_estimate=pl.CostEstimate(flops=flops,
                                      transcendentals=transcendentals,
                                      bytes_accessed=bytes_accessed),
    )(x, wq, wk, wv, bq, bk, bv, wout, bout)


def reference_mha(x, w_qkv, b_qkv, w_out, b_out, num_heads):
    """Plain-JAX reference mirroring the PyTorch forward (eval mode)."""
    B, S, D = x.shape
    hd = D // num_heads
    scale = hd ** (-0.5)
    qkv = x @ w_qkv.T + b_qkv                                   # (B, S, 3D)
    qkv = qkv.reshape(B, S, 3, num_heads, hd).transpose(2, 0, 3, 1, 4)
    q, k, v = qkv[0], qkv[1], qkv[2]                            # (B, H, S, hd)
    scores = jnp.einsum('bhqd,bhkd->bhqk', q, k) * scale
    w = jax.nn.softmax(scores, axis=-1)
    attn = jnp.einsum('bhqk,bhkd->bhqd', w, v)                  # (B, H, S, hd)
    attn = attn.transpose(0, 2, 1, 3).reshape(B, S, D)
    return attn @ w_out.T + b_out


if __name__ == "__main__":
    # small shapes consistent with the module: batch=2, seq=8, d_model=32, heads=4
    B, S, D, H = 2, 8, 32, 4
    key = jax.random.PRNGKey(0)
    kx, k1, k2, k3, k4 = jax.random.split(key, 5)

    x = jax.random.normal(kx, (B, S, D), dtype=jnp.float32)
    # PyTorch Linear layout: (out_features, in_features)
    w_qkv = jax.random.normal(k1, (3 * D, D), dtype=jnp.float32) * 0.05
    b_qkv = jax.random.normal(k2, (3 * D,), dtype=jnp.float32) * 0.05
    w_out = jax.random.normal(k3, (D, D), dtype=jnp.float32) * 0.05
    b_out = jax.random.normal(k4, (D,), dtype=jnp.float32) * 0.05

    ref = reference_mha(x, w_qkv, b_qkv, w_out, b_out, H)

    # --- f32 run, exact reciprocal (tight parity check) ---
    params_f32 = prepare_mha_params(w_qkv, b_qkv, w_out, b_out, H)
    out_f32 = jax.block_until_ready(
        multi_head_attention(x, params_f32, H, approx_softmax_recip=False))
    assert out_f32.shape == (B, S, D)
    err32 = jnp.max(jnp.abs(out_f32 - ref))
    assert jnp.allclose(out_f32, ref, atol=2e-3, rtol=2e-3), f"f32 max err {err32}"

    # --- bf16 run (MXU-native operands, f32 accumulation, approx reciprocal) ---
    params_bf16 = prepare_mha_params(w_qkv, b_qkv, w_out, b_out, H,
                                     dtype=jnp.bfloat16)
    out_bf16 = jax.block_until_ready(
        multi_head_attention(x.astype(jnp.bfloat16), params_bf16, H,
                             approx_softmax_recip=True))
    assert out_bf16.shape == (B, S, D)
    err_bf = jnp.max(jnp.abs(out_bf16.astype(jnp.float32) - ref))
    assert err_bf < 5e-2, f"bf16 max err {err_bf}"

    print("KERNEL_OK")
</pallas_src>

<mosaic_0001>
module attributes {stable_mosaic.version = 11 : i64} {
  func.func @mha_kernel(%arg0: i32, %arg1: memref<1x8x32xf32, #tpu.memory_space<vmem>>, %arg2: memref<32x32xf32, #tpu.memory_space<vmem>>, %arg3: memref<32x32xf32, #tpu.memory_space<vmem>>, %arg4: memref<32x32xf32, #tpu.memory_space<vmem>>, %arg5: memref<1x32xf32, #tpu.memory_space<vmem>>, %arg6: memref<1x32xf32, #tpu.memory_space<vmem>>, %arg7: memref<1x32xf32, #tpu.memory_space<vmem>>, %arg8: memref<32x32xf32, #tpu.memory_space<vmem>>, %arg9: memref<1x32xf32, #tpu.memory_space<vmem>>, %arg10: memref<1x8x32xf32, #tpu.memory_space<vmem>>) attributes {dimension_semantics = [#tpu.dimension_semantics<parallel>], iteration_bounds = array<i64: 2>, scalar_prefetch = 0 : i64, scratch_operands = 0 : i64, tpu.core_type = #tpu.core_type<tc>, window_params = [{transform_indices = @transform_0, window_bounds = array<i64: 1, 8, 32>}, {pipeline_mode = #tpu.pipeline_mode<synchronous>, transform_indices = @transform_1, window_bounds = array<i64: 32, 32>}, {pipeline_mode = #tpu.pipeline_mode<synchronous>, transform_indices = @transform_2, window_bounds = array<i64: 32, 32>}, {pipeline_mode = #tpu.pipeline_mode<synchronous>, transform_indices = @transform_3, window_bounds = array<i64: 32, 32>}, {pipeline_mode = #tpu.pipeline_mode<synchronous>, transform_indices = @transform_4, window_bounds = array<i64: 1, 32>}, {pipeline_mode = #tpu.pipeline_mode<synchronous>, transform_indices = @transform_5, window_bounds = array<i64: 1, 32>}, {pipeline_mode = #tpu.pipeline_mode<synchronous>, transform_indices = @transform_6, window_bounds = array<i64: 1, 32>}, {pipeline_mode = #tpu.pipeline_mode<synchronous>, transform_indices = @transform_7, window_bounds = array<i64: 32, 32>}, {pipeline_mode = #tpu.pipeline_mode<synchronous>, transform_indices = @transform_8, window_bounds = array<i64: 1, 32>}, {transform_indices = @transform_9, window_bounds = array<i64: 1, 8, 32>}]} {
    %c0 = arith.constant 0 : index
    %c0_0 = arith.constant 0 : index
    %c0_1 = arith.constant 0 : index
    %0 = vector.load %arg1[%c0, %c0_0, %c0_1] : memref<1x8x32xf32, #tpu.memory_space<vmem>>, vector<1x8x32xf32>
    %1 = vector.shape_cast %0 : vector<1x8x32xf32> to vector<8x32xf32>
    %c0_2 = arith.constant 0 : index
    %c0_3 = arith.constant 0 : index
    %2 = vector.load %arg2[%c0_2, %c0_3] : memref<32x32xf32, #tpu.memory_space<vmem>>, vector<32x32xf32>
    %cst = arith.constant dense<0.000000e+00> : vector<8x32xf32>
    %3 = tpu.matmul %1, %2, %cst {dimension_numbers = #tpu.dot_dimension_numbers<[1], [0], [0], [1], [0, 0, 1, 1], [], []>} : vector<8x32xf32>, vector<32x32xf32>, vector<8x32xf32> -> vector<8x32xf32>
    %c0_4 = arith.constant 0 : index
    %c0_5 = arith.constant 0 : index
    %4 = vector.load %arg5[%c0_4, %c0_5] : memref<1x32xf32, #tpu.memory_space<vmem>>, vector<1x32xf32>
    %5 = vector.broadcast %4 : vector<1x32xf32> to vector<8x32xf32>
    %6 = arith.addf %3, %5 : vector<8x32xf32>
    %c0_6 = arith.constant 0 : index
    %c0_7 = arith.constant 0 : index
    %7 = vector.load %arg3[%c0_6, %c0_7] : memref<32x32xf32, #tpu.memory_space<vmem>>, vector<32x32xf32>
    %cst_8 = arith.constant dense<0.000000e+00> : vector<8x32xf32>
    %8 = tpu.matmul %1, %7, %cst_8 {dimension_numbers = #tpu.dot_dimension_numbers<[1], [0], [0], [1], [0, 0, 1, 1], [], []>} : vector<8x32xf32>, vector<32x32xf32>, vector<8x32xf32> -> vector<8x32xf32>
    %c0_9 = arith.constant 0 : index
    %c0_10 = arith.constant 0 : index
    %9 = vector.load %arg6[%c0_9, %c0_10] : memref<1x32xf32, #tpu.memory_space<vmem>>, vector<1x32xf32>
    %10 = vector.broadcast %9 : vector<1x32xf32> to vector<8x32xf32>
    %11 = arith.addf %8, %10 : vector<8x32xf32>
    %c0_11 = arith.constant 0 : index
    %c0_12 = arith.constant 0 : index
    %12 = vector.load %arg4[%c0_11, %c0_12] : memref<32x32xf32, #tpu.memory_space<vmem>>, vector<32x32xf32>
    %cst_13 = arith.constant dense<0.000000e+00> : vector<8x32xf32>
    %13 = tpu.matmul %1, %12, %cst_13 {dimension_numbers = #tpu.dot_dimension_numbers<[1], [0], [0], [1], [0, 0, 1, 1], [], []>} : vector<8x32xf32>, vector<32x32xf32>, vector<8x32xf32> -> vector<8x32xf32>
    %c0_14 = arith.constant 0 : index
    %c0_15 = arith.constant 0 : index
    %14 = vector.load %arg7[%c0_14, %c0_15] : memref<1x32xf32, #tpu.memory_space<vmem>>, vector<1x32xf32>
    %15 = vector.broadcast %14 : vector<1x32xf32> to vector<8x32xf32>
    %16 = arith.addf %13, %15 : vector<8x32xf32>
    %17 = vector.extract_strided_slice %6 {offsets = [0, 0], sizes = [8, 8], strides = [1, 1]} : vector<8x32xf32> to vector<8x8xf32>
    %18 = vector.extract_strided_slice %11 {offsets = [0, 0], sizes = [8, 8], strides = [1, 1]} : vector<8x32xf32> to vector<8x8xf32>
    %19 = vector.extract_strided_slice %16 {offsets = [0, 0], sizes = [8, 8], strides = [1, 1]} : vector<8x32xf32> to vector<8x8xf32>
    %cst_16 = arith.constant dense<0.000000e+00> : vector<8x8xf32>
    %20 = tpu.matmul %17, %18, %cst_16 {dimension_numbers = #tpu.dot_dimension_numbers<[1], [1], [0], [0], [0, 0, 1, 0], [], []>} : vector<8x8xf32>, vector<8x8xf32>, vector<8x8xf32> -> vector<8x8xf32>
    %cst_17 = arith.constant dense<0xFF800000> : vector<8xf32>
    %21 = vector.multi_reduction <maximumf>, %20, %cst_17 [1] : vector<8x8xf32> to vector<8xf32>
    %22 = vector.shape_cast %21 : vector<8xf32> to vector<8x1xf32>
    %23 = vector.broadcast %22 : vector<8x1xf32> to vector<8x8xf32>
    %24 = arith.subf %20, %23 : vector<8x8xf32>
    %25 = math.exp %24 : vector<8x8xf32>
    %cst_18 = arith.constant dense<0.000000e+00> : vector<8xf32>
    %26 = vector.multi_reduction <add>, %25, %cst_18 [1] : vector<8x8xf32> to vector<8xf32>
    %27 = vector.shape_cast %26 : vector<8xf32> to vector<8x1xf32>
    %cst_19 = arith.constant 1.000000e+00 : f32
    %28 = vector.broadcast %cst_19 : f32 to vector<8x1xf32>
    %29 = arith.divf %28, %27 : vector<8x1xf32>
    %cst_20 = arith.constant dense<0.000000e+00> : vector<8x8xf32>
    %30 = tpu.matmul %25, %19, %cst_20 {dimension_numbers = #tpu.dot_dimension_numbers<[1], [0], [0], [1], [0, 0, 1, 1], [], []>} : vector<8x8xf32>, vector<8x8xf32>, vector<8x8xf32> -> vector<8x8xf32>
    %31 = vector.broadcast %29 : vector<8x1xf32> to vector<8x8xf32>
    %32 = arith.mulf %30, %31 : vector<8x8xf32>
    %33 = vector.extract_strided_slice %6 {offsets = [0, 8], sizes = [8, 8], strides = [1, 1]} : vector<8x32xf32> to vector<8x8xf32>
    %34 = vector.extract_strided_slice %11 {offsets = [0, 8], sizes = [8, 8], strides = [1, 1]} : vector<8x32xf32> to vector<8x8xf32>
    %35 = vector.extract_strided_slice %16 {offsets = [0, 8], sizes = [8, 8], strides = [1, 1]} : vector<8x32xf32> to vector<8x8xf32>
    %cst_21 = arith.constant dense<0.000000e+00> : vector<8x8xf32>
    %36 = tpu.matmul %33, %34, %cst_21 {dimension_numbers = #tpu.dot_dimension_numbers<[1], [1], [0], [0], [0, 0, 1, 0], [], []>} : vector<8x8xf32>, vector<8x8xf32>, vector<8x8xf32> -> vector<8x8xf32>
    %cst_22 = arith.constant dense<0xFF800000> : vector<8xf32>
    %37 = vector.multi_reduction <maximumf>, %36, %cst_22 [1] : vector<8x8xf32> to vector<8xf32>
    %38 = vector.shape_cast %37 : vector<8xf32> to vector<8x1xf32>
    %39 = vector.broadcast %38 : vector<8x1xf32> to vector<8x8xf32>
    %40 = arith.subf %36, %39 : vector<8x8xf32>
    %41 = math.exp %40 : vector<8x8xf32>
    %cst_23 = arith.constant dense<0.000000e+00> : vector<8xf32>
    %42 = vector.multi_reduction <add>, %41, %cst_23 [1] : vector<8x8xf32> to vector<8xf32>
    %43 = vector.shape_cast %42 : vector<8xf32> to vector<8x1xf32>
    %cst_24 = arith.constant 1.000000e+00 : f32
    %44 = vector.broadcast %cst_24 : f32 to vector<8x1xf32>
    %45 = arith.divf %44, %43 : vector<8x1xf32>
    %cst_25 = arith.constant dense<0.000000e+00> : vector<8x8xf32>
    %46 = tpu.matmul %41, %35, %cst_25 {dimension_numbers = #tpu.dot_dimension_numbers<[1], [0], [0], [1], [0, 0, 1, 1], [], []>} : vector<8x8xf32>, vector<8x8xf32>, vector<8x8xf32> -> vector<8x8xf32>
    %47 = vector.broadcast %45 : vector<8x1xf32> to vector<8x8xf32>
    %48 = arith.mulf %46, %47 : vector<8x8xf32>
    %49 = vector.extract_strided_slice %6 {offsets = [0, 16], sizes = [8, 8], strides = [1, 1]} : vector<8x32xf32> to vector<8x8xf32>
    %50 = vector.extract_strided_slice %11 {offsets = [0, 16], sizes = [8, 8], strides = [1, 1]} : vector<8x32xf32> to vector<8x8xf32>
    %51 = vector.extract_strided_slice %16 {offsets = [0, 16], sizes = [8, 8], strides = [1, 1]} : vector<8x32xf32> to vector<8x8xf32>
    %cst_26 = arith.constant dense<0.000000e+00> : vector<8x8xf32>
    %52 = tpu.matmul %49, %50, %cst_26 {dimension_numbers = #tpu.dot_dimension_numbers<[1], [1], [0], [0], [0, 0, 1, 0], [], []>} : vector<8x8xf32>, vector<8x8xf32>, vector<8x8xf32> -> vector<8x8xf32>
    %cst_27 = arith.constant dense<0xFF800000> : vector<8xf32>
    %53 = vector.multi_reduction <maximumf>, %52, %cst_27 [1] : vector<8x8xf32> to vector<8xf32>
    %54 = vector.shape_cast %53 : vector<8xf32> to vector<8x1xf32>
    %55 = vector.broadcast %54 : vector<8x1xf32> to vector<8x8xf32>
    %56 = arith.subf %52, %55 : vector<8x8xf32>
    %57 = math.exp %56 : vector<8x8xf32>
    %cst_28 = arith.constant dense<0.000000e+00> : vector<8xf32>
    %58 = vector.multi_reduction <add>, %57, %cst_28 [1] : vector<8x8xf32> to vector<8xf32>
    %59 = vector.shape_cast %58 : vector<8xf32> to vector<8x1xf32>
    %cst_29 = arith.constant 1.000000e+00 : f32
    %60 = vector.broadcast %cst_29 : f32 to vector<8x1xf32>
    %61 = arith.divf %60, %59 : vector<8x1xf32>
    %cst_30 = arith.constant dense<0.000000e+00> : vector<8x8xf32>
    %62 = tpu.matmul %57, %51, %cst_30 {dimension_numbers = #tpu.dot_dimension_numbers<[1], [0], [0], [1], [0, 0, 1, 1], [], []>} : vector<8x8xf32>, vector<8x8xf32>, vector<8x8xf32> -> vector<8x8xf32>
    %63 = vector.broadcast %61 : vector<8x1xf32> to vector<8x8xf32>
    %64 = arith.mulf %62, %63 : vector<8x8xf32>
    %65 = vector.extract_strided_slice %6 {offsets = [0, 24], sizes = [8, 8], strides = [1, 1]} : vector<8x32xf32> to vector<8x8xf32>
    %66 = vector.extract_strided_slice %11 {offsets = [0, 24], sizes = [8, 8], strides = [1, 1]} : vector<8x32xf32> to vector<8x8xf32>
    %67 = vector.extract_strided_slice %16 {offsets = [0, 24], sizes = [8, 8], strides = [1, 1]} : vector<8x32xf32> to vector<8x8xf32>
    %cst_31 = arith.constant dense<0.000000e+00> : vector<8x8xf32>
    %68 = tpu.matmul %65, %66, %cst_31 {dimension_numbers = #tpu.dot_dimension_numbers<[1], [1], [0], [0], [0, 0, 1, 0], [], []>} : vector<8x8xf32>, vector<8x8xf32>, vector<8x8xf32> -> vector<8x8xf32>
    %cst_32 = arith.constant dense<0xFF800000> : vector<8xf32>
    %69 = vector.multi_reduction <maximumf>, %68, %cst_32 [1] : vector<8x8xf32> to vector<8xf32>
    %70 = vector.shape_cast %69 : vector<8xf32> to vector<8x1xf32>
    %71 = vector.broadcast %70 : vector<8x1xf32> to vector<8x8xf32>
    %72 = arith.subf %68, %71 : vector<8x8xf32>
    %73 = math.exp %72 : vector<8x8xf32>
    %cst_33 = arith.constant dense<0.000000e+00> : vector<8xf32>
    %74 = vector.multi_reduction <add>, %73, %cst_33 [1] : vector<8x8xf32> to vector<8xf32>
    %75 = vector.shape_cast %74 : vector<8xf32> to vector<8x1xf32>
    %cst_34 = arith.constant 1.000000e+00 : f32
    %76 = vector.broadcast %cst_34 : f32 to vector<8x1xf32>
    %77 = arith.divf %76, %75 : vector<8x1xf32>
    %cst_35 = arith.constant dense<0.000000e+00> : vector<8x8xf32>
    %78 = tpu.matmul %73, %67, %cst_35 {dimension_numbers = #tpu.dot_dimension_numbers<[1], [0], [0], [1], [0, 0, 1, 1], [], []>} : vector<8x8xf32>, vector<8x8xf32>, vector<8x8xf32> -> vector<8x8xf32>
    %79 = vector.broadcast %77 : vector<8x1xf32> to vector<8x8xf32>
    %80 = arith.mulf %78, %79 : vector<8x8xf32>
    %81 = tpu.concatenate %32, %48, %64, %80 in 1 : vector<8x8xf32>, vector<8x8xf32>, vector<8x8xf32>, vector<8x8xf32> -> vector<8x32xf32>
    %c0_36 = arith.constant 0 : index
    %c0_37 = arith.constant 0 : index
    %82 = vector.load %arg8[%c0_36, %c0_37] : memref<32x32xf32, #tpu.memory_space<vmem>>, vector<32x32xf32>
    %cst_38 = arith.constant dense<0.000000e+00> : vector<8x32xf32>
    %83 = tpu.matmul %81, %82, %cst_38 {dimension_numbers = #tpu.dot_dimension_numbers<[1], [0], [0], [1], [0, 0, 1, 1], [], []>} : vector<8x32xf32>, vector<32x32xf32>, vector<8x32xf32> -> vector<8x32xf32>
    %c0_39 = arith.constant 0 : index
    %c0_40 = arith.constant 0 : index
    %84 = vector.load %arg9[%c0_39, %c0_40] : memref<1x32xf32, #tpu.memory_space<vmem>>, vector<1x32xf32>
    %85 = vector.broadcast %84 : vector<1x32xf32> to vector<8x32xf32>
    %86 = arith.addf %83, %85 : vector<8x32xf32>
    %c0_41 = arith.constant 0 : index
    %c0_42 = arith.constant 0 : index
    %c0_43 = arith.constant 0 : index
    %87 = vector.load %arg10[%c0_41, %c0_42, %c0_43] : memref<1x8x32xf32, #tpu.memory_space<vmem>>, vector<1x8x32xf32>
    %88 = vector.shape_cast %87 : vector<1x8x32xf32> to vector<8x32xf32>
    %89 = vector.shape_cast %86 : vector<8x32xf32> to vector<1x8x32xf32>
    tpu.vector_store %arg10[%c0_41, %c0_42, %c0_43], %89 {strides = array<i32>} : memref<1x8x32xf32, #tpu.memory_space<vmem>>, vector<1x8x32xf32>,
    return
  }
  func.func @transform_0(%arg0: i32) -> (i32, i32, i32) {
    %c0_i32 = arith.constant 0 : i32
    %c0_i32_0 = arith.constant 0 : i32
    %c0_i32_1 = arith.constant 0 : i32
    return %arg0, %c0_i32, %c0_i32_0 : i32, i32, i32
  }
  func.func @transform_1(%arg0: i32) -> (i32, i32) {
    %c0_i32 = arith.constant 0 : i32
    %c0_i32_0 = arith.constant 0 : i32
    %c0_i32_1 = arith.constant 0 : i32
    return %c0_i32, %c0_i32_0 : i32, i32
  }
  func.func @transform_2(%arg0: i32) -> (i32, i32) {
    %c0_i32 = arith.constant 0 : i32
    %c0_i32_0 = arith.constant 0 : i32
    %c0_i32_1 = arith.constant 0 : i32
    return %c0_i32, %c0_i32_0 : i32, i32
  }
  func.func @transform_3(%arg0: i32) -> (i32, i32) {
    %c0_i32 = arith.constant 0 : i32
    %c0_i32_0 = arith.constant 0 : i32
    %c0_i32_1 = arith.constant 0 : i32
    return %c0_i32, %c0_i32_0 : i32, i32
  }
  func.func @transform_4(%arg0: i32) -> (i32, i32) {
    %c0_i32 = arith.constant 0 : i32
    %c0_i32_0 = arith.constant 0 : i32
    %c0_i32_1 = arith.constant 0 : i32
    return %c0_i32, %c0_i32_0 : i32, i32
  }
  func.func @transform_5(%arg0: i32) -> (i32, i32) {
    %c0_i32 = arith.constant 0 : i32
    %c0_i32_0 = arith.constant 0 : i32
    %c0_i32_1 = arith.constant 0 : i32
    return %c0_i32, %c0_i32_0 : i32, i32
  }
  func.func @transform_6(%arg0: i32) -> (i32, i32) {
    %c0_i32 = arith.constant 0 : i32
    %c0_i32_0 = arith.constant 0 : i32
    %c0_i32_1 = arith.constant 0 : i32
    return %c0_i32, %c0_i32_0 : i32, i32
  }
  func.func @transform_7(%arg0: i32) -> (i32, i32) {
    %c0_i32 = arith.constant 0 : i32
    %c0_i32_0 = arith.constant 0 : i32
    %c0_i32_1 = arith.constant 0 : i32
    return %c0_i32, %c0_i32_0 : i32, i32
  }
  func.func @transform_8(%arg0: i32) -> (i32, i32) {
    %c0_i32 = arith.constant 0 : i32
    %c0_i32_0 = arith.constant 0 : i32
    %c0_i32_1 = arith.constant 0 : i32
    return %c0_i32, %c0_i32_0 : i32, i32
  }
  func.func @transform_9(%arg0: i32) -> (i32, i32, i32) {
    %c0_i32 = arith.constant 0 : i32
    %c0_i32_0 = arith.constant 0 : i32
    %c0_i32_1 = arith.constant 0 : i32
    return %arg0, %c0_i32, %c0_i32_0 : i32, i32, i32
  }
}

</mosaic_0001>

<llo_original>
// kernel: tpu_custom_call.1
$region0: #{tpu_custom_call.1}
  #allocation0 [shape = 'u32[]', space=smem, size = 0x4, offset = 0x4, fixed_abs, tag = 'smem constant byte address 0x4 - core index']
  #allocation1 [shape = 'u32[144,128]{1,0:T(1,128)}', space=vmem, size = 0x12000, scoped, tag = 'internal scratch']
  %s0 = inlined_call_operand.hbm [shape: f32[2,8,32], index: 0, kind: input, shape index: {}]
  %s1 = inlined_call_operand.hbm [shape: f32[32,32], index: 1, kind: input, shape index: {}]
  %s2 = inlined_call_operand.hbm [shape: f32[32,32], index: 2, kind: input, shape index: {}]
  %s3 = inlined_call_operand.hbm [shape: f32[32,32], index: 3, kind: input, shape index: {}]
  %s4 = inlined_call_operand.vmem [shape: f32[1,32], index: 4, kind: input, shape index: {}]
  %s5 = inlined_call_operand.vmem [shape: f32[1,32], index: 5, kind: input, shape index: {}]
  %s6 = inlined_call_operand.vmem [shape: f32[1,32], index: 6, kind: input, shape index: {}]
  %s7 = inlined_call_operand.hbm [shape: f32[32,32], index: 7, kind: input, shape index: {}]
  %s8 = inlined_call_operand.vmem [shape: f32[1,32], index: 8, kind: input, shape index: {}]
  %s9 = inlined_call_operand.hbm [shape: f32[2,8,32], index: 9, kind: output, shape index: {}]
  %s10 = sld [smem:[#allocation0]]
  $region89: #{tpu_custom_call.1} parent=0
    _
  %s12 = ssub.s32 1, %s10
  %s13 = scalar_select 0, %s12, %s10
  $region1: #{tpu_custom_call.1} parent=0
    #allocation2 [shape = 'u8[8192]{0}', space=vmem, size = 0x2000, scoped, tag = 'input window, operand 0']
    #allocation3 [shape = 's32[2]{0}', space=sflag, size = 0x8, scoped, tag = 'scoped memory for tpu_custom_call.1']
    #allocation4 [shape = 's32[2]{0}', space=sflag, size = 0x8, scoped, tag = 'scoped memory for tpu_custom_call.1']
    #allocation5 [shape = 'u8[16384]{0}', space=vmem, size = 0x4000, scoped, tag = 'input window, operand 1, single buffered']
    #allocation6 [shape = 's32[1]{0}', space=sflag, size = 0x4, scoped, tag = 'scoped memory for tpu_custom_call.1']
    #allocation7 [shape = 'u8[16384]{0}', space=vmem, size = 0x4000, scoped, tag = 'input window, operand 2, single buffered']
    #allocation8 [shape = 'u8[16384]{0}', space=vmem, size = 0x4000, scoped, tag = 'input window, operand 3, single buffered']
    #allocation9 [shape = 's32[1]{0}', space=sflag, size = 0x4, scoped, tag = 'scoped memory for tpu_custom_call.1']
    #allocation10 [shape = 'u8[16384]{0}', space=vmem, size = 0x4000, scoped, tag = 'input window, operand 7, single buffered']
    #allocation11 [shape = 'u8[8192]{0}', space=vmem, size = 0x2000, scoped, tag = 'output window, operand 0']
    %14 = vsyncpa [#allocation3], 0
    %s15 = scalar_lea.sflag [#allocation3], 1
    %16 = vsyncpa %s15, 0
    %17 = vsyncpa [#allocation6], 0
    %18 = vsyncpa [#allocation9], 0
    %19 = vsyncpa [#allocation4], 0
    %s20 = scalar_lea.sflag [#allocation4], 1
    %21 = vsyncpa %s20, 0
    loop: start=0, step=1, limit=4
    $region2: #{tpu_custom_call.1} parent=1 // loop_pre_header
      _
    $region3: #{tpu_custom_call.1} parent=1 // loop_header
      %s23 = sphi 0, %s27
      %p24 = scmp.ge.s32.totalorder %s23, 4
      %s33 = sphi 0, %s35
      %s36 = sphi 0, %s33
      %s37 = sphi 0, %s36
      %s53 = sphi 0, %s37
      %s57 = sphi 0, %s57
      %s59 = sphi 0, %s57
      %s60 = sphi 0, %s59
      %s74 = sphi 0, %s60
      %s78 = sphi 0, %s78
      %s80 = sphi 0, %s78
      %s81 = sphi 0, %s80
      %s95 = sphi 0, %s81
      %s99 = sphi 0, %s99
      %s101 = sphi 0, %s99
      %s102 = sphi 0, %s101
      %s116 = sphi 0, %s102
      %s120 = sphi 0, %s120
      %s122 = sphi 0, %s120
      %s123 = sphi 0, %s122
      %s137 = sphi 0, %s123
      %s141 = sphi 0, %s141
      %s143 = sphi 0, %s141
      %s144 = sphi 0, %s143
      %s158 = sphi 0, %s144
      %s162 = sphi 0, %s162
      %s164 = sphi 0, %s162
      %s165 = sphi 0, %s164
      %s179 = sphi 0, %s165
      %s183 = sphi 0, %s183
      %s185 = sphi 0, %s183
      %s186 = sphi 0, %s185
      %s200 = sphi 0, %s186
      %s204 = sphi 0, %s204
      %s206 = sphi 0, %s204
      %s207 = sphi 0, %s206
      %s221 = sphi 0, %s207
      %s227 = sphi 0, %s229
      %s230 = sphi 0, %s227
      %s231 = sphi 0, %s230
      %s247 = sphi 0, %s231
    $region4: #{tpu_custom_call.1} parent=1 // loop_header_branch
      %26 = sbr.rel (%p24) target = $region8
    $region5: #{tpu_custom_call.1} parent=1 // loop_body
      %s28 = ssub.s32 %s23, 1
      %s29 = ssub.s32 %s23, 2
      %s30 = sadd.s32 %s23, 1
      %s31 = ssub.s32 %s23, %s30
      %p32 = scmp.eq.s32.totalorder %s31, 0
      %s34 = sadd.s32 %s33, 1
      %s35 = scalar_select %p32, %s33, %s34
      %p38 = pneg %p32
      %p39 = scmp.eq.s32.totalorder %s23, 1
      %p40 = por %p38, %p39
      %p41 = scmp.ne.s32.totalorder %s33, %s36
      %p42 = scmp.eq.s32.totalorder %s23, 0
      %p43 = por %p41, %p42
      %p44 = scmp.ne.s32.totalorder %s33, %s36
      %p45 = scmp.eq.s32.totalorder %s28, 1
      %p46 = por %p44, %p45
      %p47 = scmp.ne.s32.totalorder %s36, %s37
      %p48 = scmp.eq.s32.totalorder %s28, 0
      %p49 = por %p47, %p48
      %p50 = scmp.ne.s32.totalorder %s36, %s37
      %p51 = scmp.eq.s32.totalorder %s29, 1
      %p52 = por %p50, %p51
      %p54 = scmp.ne.s32.totalorder %s37, %s53
      %p55 = scmp.eq.s32.totalorder %s29, 0
      %p56 = por %p54, %p55
      %s58 = sadd.s32 %s57, 1
      %p61 = scmp.eq.s32.totalorder %s23, 1
      %p62 = scmp.ne.s32.totalorder %s57, %s59
      %p63 = scmp.eq.s32.totalorder %s23, 0
      %p64 = por %p62, %p63
      %p65 = scmp.ne.s32.totalorder %s57, %s59
      %p66 = scmp.eq.s32.totalorder %s28, 1
      %p67 = por %p65, %p66
      %p68 = scmp.ne.s32.totalorder %s59, %s60
      %p69 = scmp.eq.s32.totalorder %s28, 0
      %p70 = por %p68, %p69
      %p71 = scmp.ne.s32.totalorder %s59, %s60
      %p72 = scmp.eq.s32.totalorder %s29, 1
      %p73 = por %p71, %p72
      %p75 = scmp.ne.s32.totalorder %s60, %s74
      %p76 = scmp.eq.s32.totalorder %s29, 0
      %p77 = por %p75, %p76
      %s79 = sadd.s32 %s78, 1
      %p82 = scmp.eq.s32.totalorder %s23, 1
      %p83 = scmp.ne.s32.totalorder %s78, %s80
      %p84 = scmp.eq.s32.totalorder %s23, 0
      %p85 = por %p83, %p84
      %p86 = scmp.ne.s32.totalorder %s78, %s80
      %p87 = scmp.eq.s32.totalorder %s28, 1
      %p88 = por %p86, %p87
      %p89 = scmp.ne.s32.totalorder %s80, %s81
      %p90 = scmp.eq.s32.totalorder %s28, 0
      %p91 = por %p89, %p90
      %p92 = scmp.ne.s32.totalorder %s80, %s81
      %p93 = scmp.eq.s32.totalorder %s29, 1
      %p94 = por %p92, %p93
      %p96 = scmp.ne.s32.totalorder %s81, %s95
      %p97 = scmp.eq.s32.totalorder %s29, 0
      %p98 = por %p96, %p97
      %s100 = sadd.s32 %s99, 1
      %p103 = scmp.eq.s32.totalorder %s23, 1
      %p104 = scmp.ne.s32.totalorder %s99, %s101
      %p105 = scmp.eq.s32.totalorder %s23, 0
      %p106 = por %p104, %p105
      %p107 = scmp.ne.s32.totalorder %s99, %s101
      %p108 = scmp.eq.s32.totalorder %s28, 1
      %p109 = por %p107, %p108
      %p110 = scmp.ne.s32.totalorder %s101, %s102
      %p111 = scmp.eq.s32.totalorder %s28, 0
      %p112 = por %p110, %p111
      %p113 = scmp.ne.s32.totalorder %s101, %s102
      %p114 = scmp.eq.s32.totalorder %s29, 1
      %p115 = por %p113, %p114
      %p117 = scmp.ne.s32.totalorder %s102, %s116
      %p118 = scmp.eq.s32.totalorder %s29, 0
      %p119 = por %p117, %p118
      %s121 = sadd.s32 %s120, 1
      %p124 = scmp.eq.s32.totalorder %s23, 1
      %p125 = scmp.ne.s32.totalorder %s120, %s122
      %p126 = scmp.eq.s32.totalorder %s23, 0
      %p127 = por %p125, %p126
      %p128 = scmp.ne.s32.totalorder %s120, %s122
      %p129 = scmp.eq.s32.totalorder %s28, 1
      %p130 = por %p128, %p129
      %p131 = scmp.ne.s32.totalorder %s122, %s123
      %p132 = scmp.eq.s32.totalorder %s28, 0
      %p133 = por %p131, %p132
      %p134 = scmp.ne.s32.totalorder %s122, %s123
      %p135 = scmp.eq.s32.totalorder %s29, 1
      %p136 = por %p134, %p135
      %p138 = scmp.ne.s32.totalorder %s123, %s137
      %p139 = scmp.eq.s32.totalorder %s29, 0
      %p140 = por %p138, %p139
      %s142 = sadd.s32 %s141, 1
      %p145 = scmp.eq.s32.totalorder %s23, 1
      %p146 = scmp.ne.s32.totalorder %s141, %s143
      %p147 = scmp.eq.s32.totalorder %s23, 0
      %p148 = por %p146, %p147
      %p149 = scmp.ne.s32.totalorder %s141, %s143
      %p150 = scmp.eq.s32.totalorder %s28, 1
      %p151 = por %p149, %p150
      %p152 = scmp.ne.s32.totalorder %s143, %s144
      %p153 = scmp.eq.s32.totalorder %s28, 0
      %p154 = por %p152, %p153
      %p155 = scmp.ne.s32.totalorder %s143, %s144
      %p156 = scmp.eq.s32.totalorder %s29, 1
      %p157 = por %p155, %p156
      %p159 = scmp.ne.s32.totalorder %s144, %s158
      %p160 = scmp.eq.s32.totalorder %s29, 0
      %p161 = por %p159, %p160
      %s163 = sadd.s32 %s162, 1
      %p166 = scmp.eq.s32.totalorder %s23, 1
      %p167 = scmp.ne.s32.totalorder %s162, %s164
      %p168 = scmp.eq.s32.totalorder %s23, 0
      %p169 = por %p167, %p168
      %p170 = scmp.ne.s32.totalorder %s162, %s164
      %p171 = scmp.eq.s32.totalorder %s28, 1
      %p172 = por %p170, %p171
      %p173 = scmp.ne.s32.totalorder %s164, %s165
      %p174 = scmp.eq.s32.totalorder %s28, 0
      %p175 = por %p173, %p174
      %p176 = scmp.ne.s32.totalorder %s164, %s165
      %p177 = scmp.eq.s32.totalorder %s29, 1
      %p178 = por %p176, %p177
      %p180 = scmp.ne.s32.totalorder %s165, %s179
      %p181 = scmp.eq.s32.totalorder %s29, 0
      %p182 = por %p180, %p181
      %s184 = sadd.s32 %s183, 1
      %p187 = scmp.eq.s32.totalorder %s23, 1
      %p188 = scmp.ne.s32.totalorder %s183, %s185
      %p189 = scmp.eq.s32.totalorder %s23, 0
      %p190 = por %p188, %p189
      %p191 = scmp.ne.s32.totalorder %s183, %s185
      %p192 = scmp.eq.s32.totalorder %s28, 1
      %p193 = por %p191, %p192
      %p194 = scmp.ne.s32.totalorder %s185, %s186
      %p195 = scmp.eq.s32.totalorder %s28, 0
      %p196 = por %p194, %p195
      %p197 = scmp.ne.s32.totalorder %s185, %s186
      %p198 = scmp.eq.s32.totalorder %s29, 1
      %p199 = por %p197, %p198
      %p201 = scmp.ne.s32.totalorder %s186, %s200
      %p202 = scmp.eq.s32.totalorder %s29, 0
      %p203 = por %p201, %p202
      %s205 = sadd.s32 %s204, 1
      %p208 = scmp.eq.s32.totalorder %s23, 1
      %p209 = scmp.ne.s32.totalorder %s204, %s206
      %p210 = scmp.eq.s32.totalorder %s23, 0
      %p211 = por %p209, %p210
      %p212 = scmp.ne.s32.totalorder %s204, %s206
      %p213 = scmp.eq.s32.totalorder %s28, 1
      %p214 = por %p212, %p213
      %p215 = scmp.ne.s32.totalorder %s206, %s207
      %p216 = scmp.eq.s32.totalorder %s28, 0
      %p217 = por %p215, %p216
      %p218 = scmp.ne.s32.totalorder %s206, %s207
      %p219 = scmp.eq.s32.totalorder %s29, 1
      %p220 = por %p218, %p219
      %p222 = scmp.ne.s32.totalorder %s207, %s221
      %p223 = scmp.eq.s32.totalorder %s29, 0
      %p224 = por %p222, %p223
      %s225 = ssub.s32 %s23, %s30
      %p226 = scmp.eq.s32.totalorder %s225, 0
      %s228 = sadd.s32 %s227, 1
      %s229 = scalar_select %p226, %s227, %s228
      %p232 = pneg %p226
      %p233 = scmp.eq.s32.totalorder %s23, 1
      %p234 = por %p232, %p233
      %p235 = scmp.ne.s32.totalorder %s227, %s230
      %p236 = scmp.eq.s32.totalorder %s23, 0
      %p237 = por %p235, %p236
      %p238 = scmp.ne.s32.totalorder %s227, %s230
      %p239 = scmp.eq.s32.totalorder %s28, 1
      %p240 = por %p238, %p239
      %p241 = scmp.ne.s32.totalorder %s230, %s231
      %p242 = scmp.eq.s32.totalorder %s28, 0
      %p243 = por %p241, %p242
      %p244 = scmp.ne.s32.totalorder %s230, %s231
      %p245 = scmp.eq.s32.totalorder %s29, 1
      %p246 = por %p244, %p245
      %p248 = scmp.ne.s32.totalorder %s231, %s247
      %p249 = scmp.eq.s32.totalorder %s29, 0
      %p250 = por %p248, %p249
      %p251 = scmp.le.s32.totalorder 1, %s23
      %p252 = scmp.lt.s32.totalorder %s23, 3
      %p253 = pnand %p251, %p252
      %p254 = pneg %p253
      // Predicated region
      $region9: #{tpu_custom_call.1} parent=5 // pred_check
        _
      $region10: #{tpu_custom_call.1} parent=5 // pred_check_branch
        %256 = sbr.rel (%p253) target = $region12
      $region11: #{tpu_custom_call.1} parent=5 // pred_region
        %s257 = ssub.s32 %s23, 1
        // Predicated region
        $region13: #{tpu_custom_call.1} parent=11 // pred_check
          %p258 = pneg %p70
        $region14: #{tpu_custom_call.1} parent=11 // pred_check_branch
          %260 = sbr.rel (%p258) target = $region16
        $region15: #{tpu_custom_call.1} parent=11 // pred_region
          %s262 = ssub.s32 512, 512
          %263 = vsyncadd [#allocation6], %s262
          %s264 = sshll.u32 [#allocation5], 4
          %s265 = int_to_ptr.vmem [resolvable:$true] %s264
          %270 = dma.hbm_to_vmem [thread:$0]  %s1, 512, %s265, [#allocation6], 128, 128, 8
        $region16: #{tpu_custom_call.1} parent=11 // pred_fallthru
          _
        // Predicated region
        $region17: #{tpu_custom_call.1} parent=11 // pred_check
          %p271 = pneg %p91
        $region18: #{tpu_custom_call.1} parent=11 // pred_check_branch
          %273 = sbr.rel (%p271) target = $region20
        $region19: #{tpu_custom_call.1} parent=11 // pred_region
          %s275 = ssub.s32 512, 512
          %276 = vsyncadd [#allocation6], %s275
          %s277 = sshll.u32 [#allocation7], 4
          %s278 = int_to_ptr.vmem [resolvable:$true] %s277
          %283 = dma.hbm_to_vmem [thread:$0]  %s2, 512, %s278, [#allocation6], 128, 128, 8
        $region20: #{tpu_custom_call.1} parent=11 // pred_fallthru
          _
        // Predicated region
        $region21: #{tpu_custom_call.1} parent=11 // pred_check
          %p284 = pneg %p112
        $region22: #{tpu_custom_call.1} parent=11 // pred_check_branch
          %286 = sbr.rel (%p284) target = $region24
        $region23: #{tpu_custom_call.1} parent=11 // pred_region
          %s288 = ssub.s32 512, 512
          %289 = vsyncadd [#allocation9], %s288
          %s290 = sshll.u32 [#allocation8], 4
          %s291 = int_to_ptr.vmem [resolvable:$true] %s290
          %296 = dma.hbm_to_vmem [thread:$0]  %s3, 512, %s291, [#allocation9], 128, 128, 8
        $region24: #{tpu_custom_call.1} parent=11 // pred_fallthru
          _
        // Predicated region
        $region25: #{tpu_custom_call.1} parent=11 // pred_check
          %p297 = pneg %p133
        $region26: #{tpu_custom_call.1} parent=11 // pred_check_branch
          %299 = sbr.rel (%p297) target = $region28
        $region27: #{tpu_custom_call.1} parent=11 // pred_region
          _
        $region28: #{tpu_custom_call.1} parent=11 // pred_fallthru
          _
        // Predicated region
        $region29: #{tpu_custom_call.1} parent=11 // pred_check
          %p300 = pneg %p154
        $region30: #{tpu_custom_call.1} parent=11 // pred_check_branch
          %302 = sbr.rel (%p300) target = $region32
        $region31: #{tpu_custom_call.1} parent=11 // pred_region
          _
        $region32: #{tpu_custom_call.1} parent=11 // pred_fallthru
          _
        // Predicated region
        $region33: #{tpu_custom_call.1} parent=11 // pred_check
          %p303 = pneg %p175
        $region34: #{tpu_custom_call.1} parent=11 // pred_check_branch
          %305 = sbr.rel (%p303) target = $region36
        $region35: #{tpu_custom_call.1} parent=11 // pred_region
          _
        $region36: #{tpu_custom_call.1} parent=11 // pred_fallthru
          _
        // Predicated region
        $region37: #{tpu_custom_call.1} parent=11 // pred_check
          %p306 = pneg %p196
        $region38: #{tpu_custom_call.1} parent=11 // pred_check_branch
          %308 = sbr.rel (%p306) target = $region40
        $region39: #{tpu_custom_call.1} parent=11 // pred_region
          %s310 = ssub.s32 512, 512
          %311 = vsyncadd [#allocation9], %s310
          %s312 = sshll.u32 [#allocation10], 4
          %s313 = int_to_ptr.vmem [resolvable:$true] %s312
          %318 = dma.hbm_to_vmem [thread:$0]  %s7, 512, %s313, [#allocation9], 128, 128, 8
        $region40: #{tpu_custom_call.1} parent=11 // pred_fallthru
          _
        // Predicated region
        $region41: #{tpu_custom_call.1} parent=11 // pred_check
          %p319 = pneg %p217
        $region42: #{tpu_custom_call.1} parent=11 // pred_check_branch
          %321 = sbr.rel (%p319) target = $region44
        $region43: #{tpu_custom_call.1} parent=11 // pred_region
          _
        $region44: #{tpu_custom_call.1} parent=11 // pred_fallthru
          _
      $region12: #{tpu_custom_call.1} parent=5 // pred_fallthru
        _
      %p322 = scmp.lt.s32.totalorder %s23, 2
      // Predicated region
      $region45: #{tpu_custom_call.1} parent=5 // pred_check
        %p323 = pneg %p322
      $region46: #{tpu_custom_call.1} parent=5 // pred_check_branch
        %325 = sbr.rel (%p323) target = $region48
      $region47: #{tpu_custom_call.1} parent=5 // pred_region
        // Predicated region
        $region49: #{tpu_custom_call.1} parent=47 // pred_check
          %p326 = pneg %p43
        $region50: #{tpu_custom_call.1} parent=47 // pred_check_branch
          %328 = sbr.rel (%p326) target = $region52
        $region51: #{tpu_custom_call.1} parent=47 // pred_region
          %s329 = sand.u32 %s33, 1
          %s330 = scalar_lea.sflag [#allocation3], %s329
          %s331 = sand.u32 %s33, 1
          %s332 = smul.addr %s331, 8
          %s333 = scalar_lea.vmem [#allocation2], %s332
          %s335 = ssub.s32 128, 128
          %336 = vsyncadd %s330, %s335
          %s337 = smul.addr %s23, 128
          %s338 = scalar_lea.hbm %s0, %s337
          %s340 = sshll.u32 %s333, 4
          %s341 = int_to_ptr.vmem [resolvable:$true] %s340
          %343 = dma.hbm_to_vmem [thread:$0]  %s338, 128, %s341, %s330
        $region52: #{tpu_custom_call.1} parent=47 // pred_fallthru
          _
      $region48: #{tpu_custom_call.1} parent=5 // pred_fallthru
        _
      %p344 = scmp.le.s32.totalorder 1, %s23
      %p345 = scmp.lt.s32.totalorder %s23, 3
      %p346 = pnand %p344, %p345
      %p347 = pneg %p346
      // Predicated region
      $region53: #{tpu_custom_call.1} parent=5 // pred_check
        _
      $region54: #{tpu_custom_call.1} parent=5 // pred_check_branch
        %349 = sbr.rel (%p346) target = $region56
      $region55: #{tpu_custom_call.1} parent=5 // pred_region
        %s350 = ssub.s32 %s23, 1
        %s351 = sand.u32 %s36, 1
        %s352 = scalar_lea.sflag [#allocation3], %s351
        %s353 = sand.u32 %s36, 1
        %s354 = smul.addr %s353, 8
        %s355 = scalar_lea.vmem [#allocation2], %s354
        // Predicated region
        $region57: #{tpu_custom_call.1} parent=55 // pred_check
          %p356 = pneg %p49
        $region58: #{tpu_custom_call.1} parent=55 // pred_check_branch
          %358 = sbr.rel (%p356) target = $region60
        $region59: #{tpu_custom_call.1} parent=55 // pred_region
          %359 = dma.done %s352, 128
        $region60: #{tpu_custom_call.1} parent=55 // pred_fallthru
          _
        // Predicated region
        $region61: #{tpu_custom_call.1} parent=55 // pred_check
          %p360 = pneg %p70
        $region62: #{tpu_custom_call.1} parent=55 // pred_check_branch
          %362 = sbr.rel (%p360) target = $region64
        $region63: #{tpu_custom_call.1} parent=55 // pred_region
          %363 = dma.done [#allocation6], 512
        $region64: #{tpu_custom_call.1} parent=55 // pred_fallthru
          _
        // Predicated region
        $region65: #{tpu_custom_call.1} parent=55 // pred_check
          %p364 = pneg %p91
        $region66: #{tpu_custom_call.1} parent=55 // pred_check_branch
          %366 = sbr.rel (%p364) target = $region68
        $region67: #{tpu_custom_call.1} parent=55 // pred_region
          %367 = dma.done [#allocation6], 512
        $region68: #{tpu_custom_call.1} parent=55 // pred_fallthru
          _
        // Predicated region
        $region69: #{tpu_custom_call.1} parent=55 // pred_check
          %p368 = pneg %p112
        $region70: #{tpu_custom_call.1} parent=55 // pred_check_branch
          %370 = sbr.rel (%p368) target = $region72
        $region71: #{tpu_custom_call.1} parent=55 // pred_region
          %371 = dma.done [#allocation9], 512
        $region72: #{tpu_custom_call.1} parent=55 // pred_fallthru
          _
        // Predicated region
        $region73: #{tpu_custom_call.1} parent=55 // pred_check
          %p372 = pneg %p196
        $region74: #{tpu_custom_call.1} parent=55 // pred_check_branch
          %374 = sbr.rel (%p372) target = $region76
        $region75: #{tpu_custom_call.1} parent=55 // pred_region
          %375 = dma.done [#allocation9], 512
        $region76: #{tpu_custom_call.1} parent=55 // pred_fallthru
          _
        %s376 = sand.u32 %s36, 1
        %s377 = scalar_lea.sflag [#allocation3], %s376
        %s378 = sand.u32 %s36, 1
        %s379 = smul.addr %s378, 8
        %s380 = scalar_lea.vmem [#allocation2], %s379
        %p381 = pneg %p49
        %p382 = pneg %p46
        %p383 = pneg %p70
        %p384 = pneg %p67
        %p385 = pneg %p91
        %p386 = pneg %p88
        %p387 = pneg %p112
        %p388 = pneg %p109
        %p389 = pneg %p133
        %p390 = pneg %p130
        %p391 = pneg %p154
        %p392 = pneg %p151
        %p393 = pneg %p175
        %p394 = pneg %p172
        %p395 = pneg %p196
        %p396 = pneg %p193
        %p397 = pneg %p217
        %p398 = pneg %p214
        %p399 = pneg %p243
        %p400 = pneg %p240
        %s401 = sand.u32 %s230, 1
        %s402 = scalar_lea.sflag [#allocation4], %s401
        %s403 = sand.u32 %s230, 1
        %s404 = smul.addr %s403, 8
        %s405 = scalar_lea.vmem [#allocation11], %s404
        %v406 = vld [vmem:[%s355] sm:$0xff]
        %v407 = vld [vmem:[#allocation5] sm:$0xff]
        %v408 = vld [vmem:[#allocation5 + $0x8] sm:$0xff]
        %v409 = vld [vmem:[#allocation5 + $0x10] sm:$0xff]
        %v410 = vld [vmem:[#allocation5 + $0x18] sm:$0xff]
        %v411 = vld [vmem:[%s4] sm:$0x1]
        %v413 = vlaneseq
        %v414 = vshrl.u32 %v413, 7
        %v415 = vsub.s32 0, %v414
        %v416 = vrot.slane %v411, %v415
        %vm418 = vcmask 261120
        %v420 = vsel %vm418, %v406, 0
        %422 = vmatprep.subr.mxu0 0.0
        %423 = vmatpush1.msra.mxu0 %v407
        %424 = vmatprep.subr.mxu0 0.0
        %425 = vmatpush1.msra.mxu0 %v408
        %426 = vmatprep.subr.mxu0 0.0
        %427 = vmatpush1.msra.mxu0 %v409
        %428 = vmatprep.subr.mxu0 0.0
        %429 = vmatpush1.msra.mxu0 %v410
        %430 = vmatprep.subr.mxu0 0.0
        %431 = vmatpush1.msra.mxu0 0.0
        %432 = vmatprep.subr.mxu0 0.0
        %433 = vmatpush1.msra.mxu0 0.0
        %434 = vmatprep.subr.mxu0 0.0
        %435 = vmatpush1.msra.mxu0 0.0
        %436 = vmatprep.subr.mxu0 0.0
        %437 = vmatpush1.msra.mxu0 0.0
        %438 = vmatprep.subr.mxu0 0.0
        %439 = vmatpush1.msra.mxu0 0.0
        %440 = vmatprep.subr.mxu0 0.0
        %441 = vmatpush1.msra.mxu0 0.0
        %442 = vmatprep.subr.mxu0 0.0
        %443 = vmatpush1.msra.mxu0 0.0
        %444 = vmatprep.subr.mxu0 0.0
        %445 = vmatpush1.msra.mxu0 0.0
        %446 = vmatprep.subr.mxu0 0.0
        %447 = vmatpush1.msra.mxu0 0.0
        %448 = vmatprep.subr.mxu0 0.0
        %449 = vmatpush1.msra.mxu0 0.0
        %450 = vmatprep.subr.mxu0 0.0
        %451 = vmatpush1.msra.mxu0 0.0
        %452 = vmatprep.subr.mxu0 0.0
        %453 = vmatpush1.msra.mxu0 0.0
        %454 = vmatprep.subr.mxu0 0.0
        %455 = vmatpush1.msra.mxu0 0.0
        %456 = vmatprep.subr.mxu0 0.0
        %457 = vmatpush1.msra.mxu0 0.0
        %458 = vmatprep.subr.mxu0 0.0
        %459 = vmatpush1.msra.mxu0 0.0
        %460 = vmatprep.subr.mxu0 0.0
        %461 = vmatpush1.msra.mxu0 0.0
        %462 = vmatprep.subr.mxu0 0.0
        %463 = vmatpush1.msra.mxu0 0.0
        %464 = vmatprep.subr.mxu0 0.0
        %465 = vmatpush1.msra.mxu0 0.0
        %466 = vmatprep.subr.mxu0 0.0
        %467 = vmatpush1.msra.mxu0 0.0
        %468 = vmatprep.subr.mxu0 0.0
        %469 = vmatpush1.msra.mxu0 0.0
        %470 = vmatprep.subr.mxu0 0.0
        %471 = vmatpush1.msra.mxu0 0.0
        %472 = vmatprep.subr.mxu0 0.0
        %473 = vmatpush1.msra.mxu0 0.0
        %474 = vmatprep.subr.mxu0 0.0
        %475 = vmatpush1.msra.mxu0 0.0
        %476 = vmatprep.subr.mxu0 0.0
        %477 = vmatpush1.msra.mxu0 0.0
        %478 = vmatprep.subr.mxu0 0.0
        %479 = vmatpush1.msra.mxu0 0.0
        %480 = vmatprep.subr.mxu0 0.0
        %481 = vmatpush1.msra.mxu0 0.0
        %482 = vmatprep.subr.mxu0 0.0
        %483 = vmatpush1.msra.mxu0 0.0
        %484 = vmatprep.subr.mxu0 0.0
        %485 = vmatpush1.msra.mxu0 0.0
        %486 = vmatprep.mubr.f32.mxu0 0.0
        %487 = vmatmul.mubr.f32.gmra.mrb[0].mxu0 %v420
        %v488 = vpop.f32.mrb[0].mxu0
        %v489 = vadd.f32 %v416, %v488
        %v490 = vpop.f32.mrb[0].mxu0
        %491 = vdwg.mxu0
        %v492 = vld [vmem:[#allocation7] sm:$0xff]
        %v493 = vld [vmem:[#allocation7 + $0x8] sm:$0xff]
        %v494 = vld [vmem:[#allocation7 + $0x10] sm:$0xff]
        %v495 = vld [vmem:[#allocation7 + $0x18] sm:$0xff]
        %v496 = vld [vmem:[%s5] sm:$0x1]
        %v498 = vlaneseq
        %v499 = vshrl.u32 %v498, 7
        %v500 = vsub.s32 0, %v499
        %v501 = vrot.slane %v496, %v500
        %503 = vmatprep.subr.mxu0 0.0
        %504 = vmatpush1.msra.mxu0 %v492
        %505 = vmatprep.subr.mxu0 0.0
        %506 = vmatpush1.msra.mxu0 %v493
        %507 = vmatprep.subr.mxu0 0.0
        %508 = vmatpush1.msra.mxu0 %v494
        %509 = vmatprep.subr.mxu0 0.0
        %510 = vmatpush1.msra.mxu0 %v495
        %511 = vmatprep.subr.mxu0 0.0
        %512 = vmatpush1.msra.mxu0 0.0
        %513 = vmatprep.subr.mxu0 0.0
        %514 = vmatpush1.msra.mxu0 0.0
        %515 = vmatprep.subr.mxu0 0.0
        %516 = vmatpush1.msra.mxu0 0.0
        %517 = vmatprep.subr.mxu0 0.0
        %518 = vmatpush1.msra.mxu0 0.0
        %519 = vmatprep.subr.mxu0 0.0
        %520 = vmatpush1.msra.mxu0 0.0
        %521 = vmatprep.subr.mxu0 0.0
        %522 = vmatpush1.msra.mxu0 0.0
        %523 = vmatprep.subr.mxu0 0.0
        %524 = vmatpush1.msra.mxu0 0.0
        %525 = vmatprep.subr.mxu0 0.0
        %526 = vmatpush1.msra.mxu0 0.0
        %527 = vmatprep.subr.mxu0 0.0
        %528 = vmatpush1.msra.mxu0 0.0
        %529 = vmatprep.subr.mxu0 0.0
        %530 = vmatpush1.msra.mxu0 0.0
        %531 = vmatprep.subr.mxu0 0.0
        %532 = vmatpush1.msra.mxu0 0.0
        %533 = vmatprep.subr.mxu0 0.0
        %534 = vmatpush1.msra.mxu0 0.0
        %535 = vmatprep.subr.mxu0 0.0
        %536 = vmatpush1.msra.mxu0 0.0
        %537 = vmatprep.subr.mxu0 0.0
        %538 = vmatpush1.msra.mxu0 0.0
        %539 = vmatprep.subr.mxu0 0.0
        %540 = vmatpush1.msra.mxu0 0.0
        %541 = vmatprep.subr.mxu0 0.0
        %542 = vmatpush1.msra.mxu0 0.0
        %543 = vmatprep.subr.mxu0 0.0
        %544 = vmatpush1.msra.mxu0 0.0
        %545 = vmatprep.subr.mxu0 0.0
        %546 = vmatpush1.msra.mxu0 0.0
        %547 = vmatprep.subr.mxu0 0.0
        %548 = vmatpush1.msra.mxu0 0.0
        %549 = vmatprep.subr.mxu0 0.0
        %550 = vmatpush1.msra.mxu0 0.0
        %551 = vmatprep.subr.mxu0 0.0
        %552 = vmatpush1.msra.mxu0 0.0
        %553 = vmatprep.subr.mxu0 0.0
        %554 = vmatpush1.msra.mxu0 0.0
        %555 = vmatprep.subr.mxu0 0.0
        %556 = vmatpush1.msra.mxu0 0.0
        %557 = vmatprep.subr.mxu0 0.0
        %558 = vmatpush1.msra.mxu0 0.0
        %559 = vmatprep.subr.mxu0 0.0
        %560 = vmatpush1.msra.mxu0 0.0
        %561 = vmatprep.subr.mxu0 0.0
        %562 = vmatpush1.msra.mxu0 0.0
        %563 = vmatprep.subr.mxu0 0.0
        %564 = vmatpush1.msra.mxu0 0.0
        %565 = vmatprep.subr.mxu0 0.0
        %566 = vmatpush1.msra.mxu0 0.0
        %567 = vmatprep.mubr.f32.mxu0 0.0
        %568 = vmatmul.mubr.f32.gmra.mrb[0].mxu0 %v420
        %v569 = vpop.f32.mrb[0].mxu0
        %v570 = vadd.f32 %v501, %v569
        %v571 = vpop.f32.mrb[0].mxu0
        %572 = vdwg.mxu0
        %v573 = vld [vmem:[#allocation8] sm:$0xff]
        %v574 = vld [vmem:[#allocation8 + $0x8] sm:$0xff]
        %v575 = vld [vmem:[#allocation8 + $0x10] sm:$0xff]
        %v576 = vld [vmem:[#allocation8 + $0x18] sm:$0xff]
        %v577 = vld [vmem:[%s6] sm:$0x1]
        %v579 = vlaneseq
        %v580 = vshrl.u32 %v579, 7
        %v581 = vsub.s32 0, %v580
        %v582 = vrot.slane %v577, %v581
        %584 = vmatprep.subr.mxu0 0.0
        %585 = vmatpush1.msra.mxu0 %v573
        %586 = vmatprep.subr.mxu0 0.0
        %587 = vmatpush1.msra.mxu0 %v574
        %588 = vmatprep.subr.mxu0 0.0
        %589 = vmatpush1.msra.mxu0 %v575
        %590 = vmatprep.subr.mxu0 0.0
        %591 = vmatpush1.msra.mxu0 %v576
        %592 = vmatprep.subr.mxu0 0.0
        %593 = vmatpush1.msra.mxu0 0.0
        %594 = vmatprep.subr.mxu0 0.0
        %595 = vmatpush1.msra.mxu0 0.0
        %596 = vmatprep.subr.mxu0 0.0
        %597 = vmatpush1.msra.mxu0 0.0
        %598 = vmatprep.subr.mxu0 0.0
        %599 = vmatpush1.msra.mxu0 0.0
        %600 = vmatprep.subr.mxu0 0.0
        %601 = vmatpush1.msra.mxu0 0.0
        %602 = vmatprep.subr.mxu0 0.0
        %603 = vmatpush1.msra.mxu0 0.0
        %604 = vmatprep.subr.mxu0 0.0
        %605 = vmatpush1.msra.mxu0 0.0
        %606 = vmatprep.subr.mxu0 0.0
        %607 = vmatpush1.msra.mxu0 0.0
        %608 = vmatprep.subr.mxu0 0.0
        %609 = vmatpush1.msra.mxu0 0.0
        %610 = vmatprep.subr.mxu0 0.0
        %611 = vmatpush1.msra.mxu0 0.0
        %612 = vmatprep.subr.mxu0 0.0
        %613 = vmatpush1.msra.mxu0 0.0
        %614 = vmatprep.subr.mxu0 0.0
        %615 = vmatpush1.msra.mxu0 0.0
        %616 = vmatprep.subr.mxu0 0.0
        %617 = vmatpush1.msra.mxu0 0.0
        %618 = vmatprep.subr.mxu0 0.0
        %619 = vmatpush1.msra.mxu0 0.0
        %620 = vmatprep.subr.mxu0 0.0
        %621 = vmatpush1.msra.mxu0 0.0
        %622 = vmatprep.subr.mxu0 0.0
        %623 = vmatpush1.msra.mxu0 0.0
        %624 = vmatprep.subr.mxu0 0.0
        %625 = vmatpush1.msra.mxu0 0.0
        %626 = vmatprep.subr.mxu0 0.0
        %627 = vmatpush1.msra.mxu0 0.0
        %628 = vmatprep.subr.mxu0 0.0
        %629 = vmatpush1.msra.mxu0 0.0
        %630 = vmatprep.subr.mxu0 0.0
        %631 = vmatpush1.msra.mxu0 0.0
        %632 = vmatprep.subr.mxu0 0.0
        %633 = vmatpush1.msra.mxu0 0.0
        %634 = vmatprep.subr.mxu0 0.0
        %635 = vmatpush1.msra.mxu0 0.0
        %636 = vmatprep.subr.mxu0 0.0
        %637 = vmatpush1.msra.mxu0 0.0
        %638 = vmatprep.subr.mxu0 0.0
        %639 = vmatpush1.msra.mxu0 0.0
        %640 = vmatprep.subr.mxu0 0.0
        %641 = vmatpush1.msra.mxu0 0.0
        %642 = vmatprep.subr.mxu0 0.0
        %643 = vmatpush1.msra.mxu0 0.0
        %644 = vmatprep.subr.mxu0 0.0
        %645 = vmatpush1.msra.mxu0 0.0
        %646 = vmatprep.subr.mxu0 0.0
        %647 = vmatpush1.msra.mxu0 0.0
        %648 = vmatprep.mubr.f32.mxu0 0.0
        %649 = vmatmul.mubr.f32.gmra.mrb[0].mxu0 %v420
        %v650 = vpop.f32.mrb[0].mxu0
        %v651 = vadd.f32 %v582, %v650
        %v652 = vpop.f32.mrb[0].mxu0
        %653 = vdwg.mxu0
        %vm654 = vcmask 64512
        %v656 = vsel %vm654, %v489, 0
        %v659 = vsel %vm654, %v570, 0
        %661 = vmatprep.subr.mxu0 0.0
        %662 = vmatpush1.xpose.msra.mxu0 %v659
        %663 = vmatprep.subr.mxu0 0.0
        %664 = vmatpush1.xpose.msra.mxu0 0.0
        %665 = vmatprep.subr.mxu0 0.0
        %666 = vmatpush1.xpose.msra.mxu0 0.0
        %667 = vmatprep.subr.mxu0 0.0
        %668 = vmatpush1.xpose.msra.mxu0 0.0
        %669 = vmatprep.subr.mxu0 0.0
        %670 = vmatpush1.xpose.msra.mxu0 0.0
        %671 = vmatprep.subr.mxu0 0.0
        %672 = vmatpush1.xpose.msra.mxu0 0.0
        %673 = vmatprep.subr.mxu0 0.0
        %674 = vmatpush1.xpose.msra.mxu0 0.0
        %675 = vmatprep.subr.mxu0 0.0
        %676 = vmatpush1.xpose.msra.mxu0 0.0
        %677 = vmatprep.subr.mxu0 0.0
        %678 = vmatpush1.xpose.msra.mxu0 0.0
        %679 = vmatprep.subr.mxu0 0.0
        %680 = vmatpush1.xpose.msra.mxu0 0.0
        %681 = vmatprep.subr.mxu0 0.0
        %682 = vmatpush1.xpose.msra.mxu0 0.0
        %683 = vmatprep.subr.mxu0 0.0
        %684 = vmatpush1.xpose.msra.mxu0 0.0
        %685 = vmatprep.subr.mxu0 0.0
        %686 = vmatpush1.xpose.msra.mxu0 0.0
        %687 = vmatprep.subr.mxu0 0.0
        %688 = vmatpush1.xpose.msra.mxu0 0.0
        %689 = vmatprep.subr.mxu0 0.0
        %690 = vmatpush1.xpose.msra.mxu0 0.0
        %691 = vmatprep.subr.mxu0 0.0
        %692 = vmatpush1.xpose.msra.mxu0 0.0
        %693 = vmatprep.subr.mxu0 0.0
        %694 = vmatpush1.xpose.msra.mxu0 0.0
        %695 = vmatprep.subr.mxu0 0.0
        %696 = vmatpush1.xpose.msra.mxu0 0.0
        %697 = vmatprep.subr.mxu0 0.0
        %698 = vmatpush1.xpose.msra.mxu0 0.0
        %699 = vmatprep.subr.mxu0 0.0
        %700 = vmatpush1.xpose.msra.mxu0 0.0
        %701 = vmatprep.subr.mxu0 0.0
        %702 = vmatpush1.xpose.msra.mxu0 0.0
        %703 = vmatprep.subr.mxu0 0.0
        %704 = vmatpush1.xpose.msra.mxu0 0.0
        %705 = vmatprep.subr.mxu0 0.0
        %706 = vmatpush1.xpose.msra.mxu0 0.0
        %707 = vmatprep.subr.mxu0 0.0
        %708 = vmatpush1.xpose.msra.mxu0 0.0
        %709 = vmatprep.subr.mxu0 0.0
        %710 = vmatpush1.xpose.msra.mxu0 0.0
        %711 = vmatprep.subr.mxu0 0.0
        %712 = vmatpush1.xpose.msra.mxu0 0.0
        %713 = vmatprep.subr.mxu0 0.0
        %714 = vmatpush1.xpose.msra.mxu0 0.0
        %715 = vmatprep.subr.mxu0 0.0
        %716 = vmatpush1.xpose.msra.mxu0 0.0
        %717 = vmatprep.subr.mxu0 0.0
        %718 = vmatpush1.xpose.msra.mxu0 0.0
        %719 = vmatprep.subr.mxu0 0.0
        %720 = vmatpush1.xpose.msra.mxu0 0.0
        %721 = vmatprep.subr.mxu0 0.0
        %722 = vmatpush1.xpose.msra.mxu0 0.0
        %723 = vmatprep.subr.mxu0 0.0
        %724 = vmatpush1.xpose.msra.mxu0 0.0
        %725 = vmatprep.mubr.f32.mxu0 0.0
        %726 = vmatmul.mubr.f32.gmra.mrb[0].mxu0 %v656
        %v727 = vpop.f32.mrb[0].mxu0
        %v728 = vadd.f32 0.0, %v727
        %v729 = vpop.f32.mrb[0].mxu0
        %730 = vdwg.mxu0
        %v731 = vsel %vm654, %v728, -inf
        %732 = vmax.xlane.f32.xlu0 %v731
        %v733 = vpop.xlane.xlu0 %732
        %v734 = vsub.f32 %v728, %v733
        %v735 = vmul.f32 %v734, 1.442695
        %v736 = vpow.pop %v735
        %v737 = vsel %vm654, %v736, 0.0
        %738 = vadd.xlane.f32.xlu0 %v737
        %v739 = vpop.xlane.xlu0 %738
        %v740 = vrcp.pop %v739
        %v741 = vmul.f32 1.0, %v740
        %v743 = vsel %vm654, %v736, 0
        %745 = vmatprep.subr.mxu0 0.0
        %746 = vmatpush1.msra.mxu0 %v651
        %747 = vmatprep.subr.mxu0 0.0
        %748 = vmatpush1.msra.mxu0 0.0
        %749 = vmatprep.subr.mxu0 0.0
        %750 = vmatpush1.msra.mxu0 0.0
        %751 = vmatprep.subr.mxu0 0.0
        %752 = vmatpush1.msra.mxu0 0.0
        %753 = vmatprep.subr.mxu0 0.0
        %754 = vmatpush1.msra.mxu0 0.0
        %755 = vmatprep.subr.mxu0 0.0
        %756 = vmatpush1.msra.mxu0 0.0
        %757 = vmatprep.subr.mxu0 0.0
        %758 = vmatpush1.msra.mxu0 0.0
        %759 = vmatprep.subr.mxu0 0.0
        %760 = vmatpush1.msra.mxu0 0.0
        %761 = vmatprep.subr.mxu0 0.0
        %762 = vmatpush1.msra.mxu0 0.0
        %763 = vmatprep.subr.mxu0 0.0
        %764 = vmatpush1.msra.mxu0 0.0
        %765 = vmatprep.subr.mxu0 0.0
        %766 = vmatpush1.msra.mxu0 0.0
        %767 = vmatprep.subr.mxu0 0.0
        %768 = vmatpush1.msra.mxu0 0.0
        %769 = vmatprep.subr.mxu0 0.0
        %770 = vmatpush1.msra.mxu0 0.0
        %771 = vmatprep.subr.mxu0 0.0
        %772 = vmatpush1.msra.mxu0 0.0
        %773 = vmatprep.subr.mxu0 0.0
        %774 = vmatpush1.msra.mxu0 0.0
        %775 = vmatprep.subr.mxu0 0.0
        %776 = vmatpush1.msra.mxu0 0.0
        %777 = vmatprep.subr.mxu0 0.0
        %778 = vmatpush1.msra.mxu0 0.0
        %779 = vmatprep.subr.mxu0 0.0
        %780 = vmatpush1.msra.mxu0 0.0
        %781 = vmatprep.subr.mxu0 0.0
        %782 = vmatpush1.msra.mxu0 0.0
        %783 = vmatprep.subr.mxu0 0.0
        %784 = vmatpush1.msra.mxu0 0.0
        %785 = vmatprep.subr.mxu0 0.0
        %786 = vmatpush1.msra.mxu0 0.0
        %787 = vmatprep.subr.mxu0 0.0
        %788 = vmatpush1.msra.mxu0 0.0
        %789 = vmatprep.subr.mxu0 0.0
        %790 = vmatpush1.msra.mxu0 0.0
        %791 = vmatprep.subr.mxu0 0.0
        %792 = vmatpush1.msra.mxu0 0.0
        %793 = vmatprep.subr.mxu0 0.0
        %794 = vmatpush1.msra.mxu0 0.0
        %795 = vmatprep.subr.mxu0 0.0
        %796 = vmatpush1.msra.mxu0 0.0
        %797 = vmatprep.subr.mxu0 0.0
        %798 = vmatpush1.msra.mxu0 0.0
        %799 = vmatprep.subr.mxu0 0.0
        %800 = vmatpush1.msra.mxu0 0.0
        %801 = vmatprep.subr.mxu0 0.0
        %802 = vmatpush1.msra.mxu0 0.0
        %803 = vmatprep.subr.mxu0 0.0
        %804 = vmatpush1.msra.mxu0 0.0
        %805 = vmatprep.subr.mxu0 0.0
        %806 = vmatpush1.msra.mxu0 0.0
        %807 = vmatprep.subr.mxu0 0.0
        %808 = vmatpush1.msra.mxu0 0.0
        %809 = vmatprep.mubr.f32.mxu0 0.0
        %810 = vmatmul.mubr.f32.gmra.mrb[0].mxu0 %v743
        %v811 = vpop.f32.mrb[0].mxu0
        %v812 = vadd.f32 0.0, %v811
        %v813 = vpop.f32.mrb[0].mxu0
        %814 = vdwg.mxu0
        %v815 = vmul.f32 %v812, %v741
        %816 = vrot.lane.b32.xlu0 %v489, 120
        %v817 = vpop.permute.xlu0 %816
        %818 = vrot.lane.b32.xlu0 %v570, 120
        %v819 = vpop.permute.xlu0 %818
        %v820 = vsel %vm654, %v817, 0
        %v822 = vsel %vm654, %v819, 0
        %824 = vmatprep.subr.mxu0 0.0
        %825 = vmatpush1.xpose.msra.mxu0 %v822
        %826 = vmatprep.subr.mxu0 0.0
        %827 = vmatpush1.xpose.msra.mxu0 0.0
        %828 = vmatprep.subr.mxu0 0.0
        %829 = vmatpush1.xpose.msra.mxu0 0.0
        %830 = vmatprep.subr.mxu0 0.0
        %831 = vmatpush1.xpose.msra.mxu0 0.0
        %832 = vmatprep.subr.mxu0 0.0
        %833 = vmatpush1.xpose.msra.mxu0 0.0
        %834 = vmatprep.subr.mxu0 0.0
        %835 = vmatpush1.xpose.msra.mxu0 0.0
        %836 = vmatprep.subr.mxu0 0.0
        %837 = vmatpush1.xpose.msra.mxu0 0.0
        %838 = vmatprep.subr.mxu0 0.0
        %839 = vmatpush1.xpose.msra.mxu0 0.0
        %840 = vmatprep.subr.mxu0 0.0
        %841 = vmatpush1.xpose.msra.mxu0 0.0
        %842 = vmatprep.subr.mxu0 0.0
        %843 = vmatpush1.xpose.msra.mxu0 0.0
        %844 = vmatprep.subr.mxu0 0.0
        %845 = vmatpush1.xpose.msra.mxu0 0.0
        %846 = vmatprep.subr.mxu0 0.0
        %847 = vmatpush1.xpose.msra.mxu0 0.0
        %848 = vmatprep.subr.mxu0 0.0
        %849 = vmatpush1.xpose.msra.mxu0 0.0
        %850 = vmatprep.subr.mxu0 0.0
        %851 = vmatpush1.xpose.msra.mxu0 0.0
        %852 = vmatprep.subr.mxu0 0.0
        %853 = vmatpush1.xpose.msra.mxu0 0.0
        %854 = vmatprep.subr.mxu0 0.0
        %855 = vmatpush1.xpose.msra.mxu0 0.0
        %856 = vmatprep.subr.mxu0 0.0
        %857 = vmatpush1.xpose.msra.mxu0 0.0
        %858 = vmatprep.subr.mxu0 0.0
        %859 = vmatpush1.xpose.msra.mxu0 0.0
        %860 = vmatprep.subr.mxu0 0.0
        %861 = vmatpush1.xpose.msra.mxu0 0.0
        %862 = vmatprep.subr.mxu0 0.0
        %863 = vmatpush1.xpose.msra.mxu0 0.0
        %864 = vmatprep.subr.mxu0 0.0
        %865 = vmatpush1.xpose.msra.mxu0 0.0
        %866 = vmatprep.subr.mxu0 0.0
        %867 = vmatpush1.xpose.msra.mxu0 0.0
        %868 = vmatprep.subr.mxu0 0.0
        %869 = vmatpush1.xpose.msra.mxu0 0.0
        %870 = vmatprep.subr.mxu0 0.0
        %871 = vmatpush1.xpose.msra.mxu0 0.0
        %872 = vmatprep.subr.mxu0 0.0
        %873 = vmatpush1.xpose.msra.mxu0 0.0
        %874 = vmatprep.subr.mxu0 0.0
        %875 = vmatpush1.xpose.msra.mxu0 0.0
        %876 = vmatprep.subr.mxu0 0.0
        %877 = vmatpush1.xpose.msra.mxu0 0.0
        %878 = vmatprep.subr.mxu0 0.0
        %879 = vmatpush1.xpose.msra.mxu0 0.0
        %880 = vmatprep.subr.mxu0 0.0
        %881 = vmatpush1.xpose.msra.mxu0 0.0
        %882 = vmatprep.subr.mxu0 0.0
        %883 = vmatpush1.xpose.msra.mxu0 0.0
        %884 = vmatprep.subr.mxu0 0.0
        %885 = vmatpush1.xpose.msra.mxu0 0.0
        %886 = vmatprep.subr.mxu0 0.0
        %887 = vmatpush1.xpose.msra.mxu0 0.0
        %888 = vmatprep.mubr.f32.mxu0 0.0
        %889 = vmatmul.mubr.f32.gmra.mrb[0].mxu0 %v820
        %v890 = vpop.f32.mrb[0].mxu0
        %v891 = vadd.f32 0.0, %v890
        %v892 = vpop.f32.mrb[0].mxu0
        %893 = vdwg.mxu0
        %v894 = vsel %vm654, %v891, -inf
        %895 = vmax.xlane.f32.xlu0 %v894
        %v896 = vpop.xlane.xlu0 %895
        %v897 = vsub.f32 %v891, %v896
        %v898 = vmul.f32 %v897, 1.442695
        %v899 = vpow.pop %v898
        %v900 = vsel %vm654, %v899, 0.0
        %901 = vadd.xlane.f32.xlu0 %v900
        %v902 = vpop.xlane.xlu0 %901
        %v903 = vrcp.pop %v902
        %v904 = vmul.f32 1.0, %v903
        %906 = vrot.lane.b32.xlu0 %v651, 120
        %v907 = vpop.permute.xlu0 %906
        %v910 = vsel %vm654, %v899, 0
        %912 = vmatprep.subr.mxu0 0.0
        %913 = vmatpush1.msra.mxu0 %v907
        %914 = vmatprep.subr.mxu0 0.0
        %915 = vmatpush1.msra.mxu0 0.0
        %916 = vmatprep.subr.mxu0 0.0
        %917 = vmatpush1.msra.mxu0 0.0
        %918 = vmatprep.subr.mxu0 0.0
        %919 = vmatpush1.msra.mxu0 0.0
        %920 = vmatprep.subr.mxu0 0.0
        %921 = vmatpush1.msra.mxu0 0.0
        %922 = vmatprep.subr.mxu0 0.0
        %923 = vmatpush1.msra.mxu0 0.0
        %924 = vmatprep.subr.mxu0 0.0
        %925 = vmatpush1.msra.mxu0 0.0
        %926 = vmatprep.subr.mxu0 0.0
        %927 = vmatpush1.msra.mxu0 0.0
        %928 = vmatprep.subr.mxu0 0.0
        %929 = vmatpush1.msra.mxu0 0.0
        %930 = vmatprep.subr.mxu0 0.0
        %931 = vmatpush1.msra.mxu0 0.0
        %932 = vmatprep.subr.mxu0 0.0
        %933 = vmatpush1.msra.mxu0 0.0
        %934 = vmatprep.subr.mxu0 0.0
        %935 = vmatpush1.msra.mxu0 0.0
        %936 = vmatprep.subr.mxu0 0.0
        %937 = vmatpush1.msra.mxu0 0.0
        %938 = vmatprep.subr.mxu0 0.0
        %939 = vmatpush1.msra.mxu0 0.0
        %940 = vmatprep.subr.mxu0 0.0
        %941 = vmatpush1.msra.mxu0 0.0
        %942 = vmatprep.subr.mxu0 0.0
        %943 = vmatpush1.msra.mxu0 0.0
        %944 = vmatprep.subr.mxu0 0.0
        %945 = vmatpush1.msra.mxu0 0.0
        %946 = vmatprep.subr.mxu0 0.0
        %947 = vmatpush1.msra.mxu0 0.0
        %948 = vmatprep.subr.mxu0 0.0
        %949 = vmatpush1.msra.mxu0 0.0
        %950 = vmatprep.subr.mxu0 0.0
        %951 = vmatpush1.msra.mxu0 0.0
        %952 = vmatprep.subr.mxu0 0.0
        %953 = vmatpush1.msra.mxu0 0.0
        %954 = vmatprep.subr.mxu0 0.0
        %955 = vmatpush1.msra.mxu0 0.0
        %956 = vmatprep.subr.mxu0 0.0
        %957 = vmatpush1.msra.mxu0 0.0
        %958 = vmatprep.subr.mxu0 0.0
        %959 = vmatpush1.msra.mxu0 0.0
        %960 = vmatprep.subr.mxu0 0.0
        %961 = vmatpush1.msra.mxu0 0.0
        %962 = vmatprep.subr.mxu0 0.0
        %963 = vmatpush1.msra.mxu0 0.0
        %964 = vmatprep.subr.mxu0 0.0
        %965 = vmatpush1.msra.mxu0 0.0
        %966 = vmatprep.subr.mxu0 0.0
        %967 = vmatpush1.msra.mxu0 0.0
        %968 = vmatprep.subr.mxu0 0.0
        %969 = vmatpush1.msra.mxu0 0.0
        %970 = vmatprep.subr.mxu0 0.0
        %971 = vmatpush1.msra.mxu0 0.0
        %972 = vmatprep.subr.mxu0 0.0
        %973 = vmatpush1.msra.mxu0 0.0
        %974 = vmatprep.subr.mxu0 0.0
        %975 = vmatpush1.msra.mxu0 0.0
        %976 = vmatprep.mubr.f32.mxu0 0.0
        %977 = vmatmul.mubr.f32.gmra.mrb[0].mxu0 %v910
        %v978 = vpop.f32.mrb[0].mxu0
        %v979 = vadd.f32 0.0, %v978
        %v980 = vpop.f32.mrb[0].mxu0
        %981 = vdwg.mxu0
        %v982 = vmul.f32 %v979, %v904
        %983 = vrot.lane.b32.xlu0 %v489, 112
        %v984 = vpop.permute.xlu0 %983
        %985 = vrot.lane.b32.xlu0 %v570, 112
        %v986 = vpop.permute.xlu0 %985
        %v987 = vsel %vm654, %v984, 0
        %v989 = vsel %vm654, %v986, 0
        %991 = vmatprep.subr.mxu0 0.0
        %992 = vmatpush1.xpose.msra.mxu0 %v989
        %993 = vmatprep.subr.mxu0 0.0
        %994 = vmatpush1.xpose.msra.mxu0 0.0
        %995 = vmatprep.subr.mxu0 0.0
        %996 = vmatpush1.xpose.msra.mxu0 0.0
        %997 = vmatprep.subr.mxu0 0.0
        %998 = vmatpush1.xpose.msra.mxu0 0.0
        %999 = vmatprep.subr.mxu0 0.0
        %1000 = vmatpush1.xpose.msra.mxu0 0.0
        %1001 = vmatprep.subr.mxu0 0.0
        %1002 = vmatpush1.xpose.msra.mxu0 0.0
        %1003 = vmatprep.subr.mxu0 0.0
        %1004 = vmatpush1.xpose.msra.mxu0 0.0
        %1005 = vmatprep.subr.mxu0 0.0
        %1006 = vmatpush1.xpose.msra.mxu0 0.0
        %1007 = vmatprep.subr.mxu0 0.0
        %1008 = vmatpush1.xpose.msra.mxu0 0.0
        %1009 = vmatprep.subr.mxu0 0.0
        %1010 = vmatpush1.xpose.msra.mxu0 0.0
        %1011 = vmatprep.subr.mxu0 0.0
        %1012 = vmatpush1.xpose.msra.mxu0 0.0
        %1013 = vmatprep.subr.mxu0 0.0
        %1014 = vmatpush1.xpose.msra.mxu0 0.0
        %1015 = vmatprep.subr.mxu0 0.0
        %1016 = vmatpush1.xpose.msra.mxu0 0.0
        %1017 = vmatprep.subr.mxu0 0.0
        %1018 = vmatpush1.xpose.msra.mxu0 0.0
        %1019 = vmatprep.subr.mxu0 0.0
        %1020 = vmatpush1.xpose.msra.mxu0 0.0
        %1021 = vmatprep.subr.mxu0 0.0
        %1022 = vmatpush1.xpose.msra.mxu0 0.0
        %1023 = vmatprep.subr.mxu0 0.0
        %1024 = vmatpush1.xpose.msra.mxu0 0.0
        %1025 = vmatprep.subr.mxu0 0.0
        %1026 = vmatpush1.xpose.msra.mxu0 0.0
        %1027 = vmatprep.subr.mxu0 0.0
        %1028 = vmatpush1.xpose.msra.mxu0 0.0
        %1029 = vmatprep.subr.mxu0 0.0
        %1030 = vmatpush1.xpose.msra.mxu0 0.0
        %1031 = vmatprep.subr.mxu0 0.0
        %1032 = vmatpush1.xpose.msra.mxu0 0.0
        %1033 = vmatprep.subr.mxu0 0.0
        %1034 = vmatpush1.xpose.msra.mxu0 0.0
        %1035 = vmatprep.subr.mxu0 0.0
        %1036 = vmatpush1.xpose.msra.mxu0 0.0
        %1037 = vmatprep.subr.mxu0 0.0
        %1038 = vmatpush1.xpose.msra.mxu0 0.0
        %1039 = vmatprep.subr.mxu0 0.0
        %1040 = vmatpush1.xpose.msra.mxu0 0.0
        %1041 = vmatprep.subr.mxu0 0.0
        %1042 = vmatpush1.xpose.msra.mxu0 0.0
        %1043 = vmatprep.subr.mxu0 0.0
        %1044 = vmatpush1.xpose.msra.mxu0 0.0
        %1045 = vmatprep.subr.mxu0 0.0
        %1046 = vmatpush1.xpose.msra.mxu0 0.0
        %1047 = vmatprep.subr.mxu0 0.0
        %1048 = vmatpush1.xpose.msra.mxu0 0.0
        %1049 = vmatprep.subr.mxu0 0.0
        %1050 = vmatpush1.xpose.msra.mxu0 0.0
        %1051 = vmatprep.subr.mxu0 0.0
        %1052 = vmatpush1.xpose.msra.mxu0 0.0
        %1053 = vmatprep.subr.mxu0 0.0
        %1054 = vmatpush1.xpose.msra.mxu0 0.0
        %1055 = vmatprep.mubr.f32.mxu0 0.0
        %1056 = vmatmul.mubr.f32.gmra.mrb[0].mxu0 %v987
        %v1057 = vpop.f32.mrb[0].mxu0
        %v1058 = vadd.f32 0.0, %v1057
        %v1059 = vpop.f32.mrb[0].mxu0
        %1060 = vdwg.mxu0
        %v1061 = vsel %vm654, %v1058, -inf
        %1062 = vmax.xlane.f32.xlu0 %v1061
        %v1063 = vpop.xlane.xlu0 %1062
        %v1064 = vsub.f32 %v1058, %v1063
        %v1065 = vmul.f32 %v1064, 1.442695
        %v1066 = vpow.pop %v1065
        %v1067 = vsel %vm654, %v1066, 0.0
        %1068 = vadd.xlane.f32.xlu0 %v1067
        %v1069 = vpop.xlane.xlu0 %1068
        %v1070 = vrcp.pop %v1069
        %v1071 = vmul.f32 1.0, %v1070
        %1072 = vrot.lane.b32.xlu0 %v651, 112
        %v1073 = vpop.permute.xlu0 %1072
        %v1076 = vsel %vm654, %v1066, 0
        %1078 = vmatprep.subr.mxu0 0.0
        %1079 = vmatpush1.msra.mxu0 %v1073
        %1080 = vmatprep.subr.mxu0 0.0
        %1081 = vmatpush1.msra.mxu0 0.0
        %1082 = vmatprep.subr.mxu0 0.0
        %1083 = vmatpush1.msra.mxu0 0.0
        %1084 = vmatprep.subr.mxu0 0.0
        %1085 = vmatpush1.msra.mxu0 0.0
        %1086 = vmatprep.subr.mxu0 0.0
        %1087 = vmatpush1.msra.mxu0 0.0
        %1088 = vmatprep.subr.mxu0 0.0
        %1089 = vmatpush1.msra.mxu0 0.0
        %1090 = vmatprep.subr.mxu0 0.0
        %1091 = vmatpush1.msra.mxu0 0.0
        %1092 = vmatprep.subr.mxu0 0.0
        %1093 = vmatpush1.msra.mxu0 0.0
        %1094 = vmatprep.subr.mxu0 0.0
        %1095 = vmatpush1.msra.mxu0 0.0
        %1096 = vmatprep.subr.mxu0 0.0
        %1097 = vmatpush1.msra.mxu0 0.0
        %1098 = vmatprep.subr.mxu0 0.0
        %1099 = vmatpush1.msra.mxu0 0.0
        %1100 = vmatprep.subr.mxu0 0.0
        %1101 = vmatpush1.msra.mxu0 0.0
        %1102 = vmatprep.subr.mxu0 0.0
        %1103 = vmatpush1.msra.mxu0 0.0
        %1104 = vmatprep.subr.mxu0 0.0
        %1105 = vmatpush1.msra.mxu0 0.0
        %1106 = vmatprep.subr.mxu0 0.0
        %1107 = vmatpush1.msra.mxu0 0.0
        %1108 = vmatprep.subr.mxu0 0.0
        %1109 = vmatpush1.msra.mxu0 0.0
        %1110 = vmatprep.subr.mxu0 0.0
        %1111 = vmatpush1.msra.mxu0 0.0
        %1112 = vmatprep.subr.mxu0 0.0
        %1113 = vmatpush1.msra.mxu0 0.0
        %1114 = vmatprep.subr.mxu0 0.0
        %1115 = vmatpush1.msra.mxu0 0.0
        %1116 = vmatprep.subr.mxu0 0.0
        %1117 = vmatpush1.msra.mxu0 0.0
        %1118 = vmatprep.subr.mxu0 0.0
        %1119 = vmatpush1.msra.mxu0 0.0
        %1120 = vmatprep.subr.mxu0 0.0
        %1121 = vmatpush1.msra.mxu0 0.0
        %1122 = vmatprep.subr.mxu0 0.0
        %1123 = vmatpush1.msra.mxu0 0.0
        %1124 = vmatprep.subr.mxu0 0.0
        %1125 = vmatpush1.msra.mxu0 0.0
        %1126 = vmatprep.subr.mxu0 0.0
        %1127 = vmatpush1.msra.mxu0 0.0
        %1128 = vmatprep.subr.mxu0 0.0
        %1129 = vmatpush1.msra.mxu0 0.0
        %1130 = vmatprep.subr.mxu0 0.0
        %1131 = vmatpush1.msra.mxu0 0.0
        %1132 = vmatprep.subr.mxu0 0.0
        %1133 = vmatpush1.msra.mxu0 0.0
        %1134 = vmatprep.subr.mxu0 0.0
        %1135 = vmatpush1.msra.mxu0 0.0
        %1136 = vmatprep.subr.mxu0 0.0
        %1137 = vmatpush1.msra.mxu0 0.0
        %1138 = vmatprep.subr.mxu0 0.0
        %1139 = vmatpush1.msra.mxu0 0.0
        %1140 = vmatprep.subr.mxu0 0.0
        %1141 = vmatpush1.msra.mxu0 0.0
        %1142 = vmatprep.mubr.f32.mxu0 0.0
        %1143 = vmatmul.mubr.f32.gmra.mrb[0].mxu0 %v1076
        %v1144 = vpop.f32.mrb[0].mxu0
        %v1145 = vadd.f32 0.0, %v1144
        %v1146 = vpop.f32.mrb[0].mxu0
        %1147 = vdwg.mxu0
        %v1148 = vmul.f32 %v1145, %v1071
        %1149 = vrot.lane.b32.xlu0 %v489, 104
        %v1150 = vpop.permute.xlu0 %1149
        %1151 = vrot.lane.b32.xlu0 %v570, 104
        %v1152 = vpop.permute.xlu0 %1151
        %v1153 = vsel %vm654, %v1150, 0
        %v1155 = vsel %vm654, %v1152, 0
        %1157 = vmatprep.subr.mxu0 0.0
        %1158 = vmatpush1.xpose.msra.mxu0 %v1155
        %1159 = vmatprep.subr.mxu0 0.0
        %1160 = vmatpush1.xpose.msra.mxu0 0.0
        %1161 = vmatprep.subr.mxu0 0.0
        %1162 = vmatpush1.xpose.msra.mxu0 0.0
        %1163 = vmatprep.subr.mxu0 0.0
        %1164 = vmatpush1.xpose.msra.mxu0 0.0
        %1165 = vmatprep.subr.mxu0 0.0
        %1166 = vmatpush1.xpose.msra.mxu0 0.0
        %1167 = vmatprep.subr.mxu0 0.0
        %1168 = vmatpush1.xpose.msra.mxu0 0.0
        %1169 = vmatprep.subr.mxu0 0.0
        %1170 = vmatpush1.xpose.msra.mxu0 0.0
        %1171 = vmatprep.subr.mxu0 0.0
        %1172 = vmatpush1.xpose.msra.mxu0 0.0
        %1173 = vmatprep.subr.mxu0 0.0
        %1174 = vmatpush1.xpose.msra.mxu0 0.0
        %1175 = vmatprep.subr.mxu0 0.0
        %1176 = vmatpush1.xpose.msra.mxu0 0.0
        %1177 = vmatprep.subr.mxu0 0.0
        %1178 = vmatpush1.xpose.msra.mxu0 0.0
        %1179 = vmatprep.subr.mxu0 0.0
        %1180 = vmatpush1.xpose.msra.mxu0 0.0
        %1181 = vmatprep.subr.mxu0 0.0
        %1182 = vmatpush1.xpose.msra.mxu0 0.0
        %1183 = vmatprep.subr.mxu0 0.0
        %1184 = vmatpush1.xpose.msra.mxu0 0.0
        %1185 = vmatprep.subr.mxu0 0.0
        %1186 = vmatpush1.xpose.msra.mxu0 0.0
        %1187 = vmatprep.subr.mxu0 0.0
        %1188 = vmatpush1.xpose.msra.mxu0 0.0
        %1189 = vmatprep.subr.mxu0 0.0
        %1190 = vmatpush1.xpose.msra.mxu0 0.0
        %1191 = vmatprep.subr.mxu0 0.0
        %1192 = vmatpush1.xpose.msra.mxu0 0.0
        %1193 = vmatprep.subr.mxu0 0.0
        %1194 = vmatpush1.xpose.msra.mxu0 0.0
        %1195 = vmatprep.subr.mxu0 0.0
        %1196 = vmatpush1.xpose.msra.mxu0 0.0
        %1197 = vmatprep.subr.mxu0 0.0
        %1198 = vmatpush1.xpose.msra.mxu0 0.0
        %1199 = vmatprep.subr.mxu0 0.0
        %1200 = vmatpush1.xpose.msra.mxu0 0.0
        %1201 = vmatprep.subr.mxu0 0.0
        %1202 = vmatpush1.xpose.msra.mxu0 0.0
        %1203 = vmatprep.subr.mxu0 0.0
        %1204 = vmatpush1.xpose.msra.mxu0 0.0
        %1205 = vmatprep.subr.mxu0 0.0
        %1206 = vmatpush1.xpose.msra.mxu0 0.0
        %1207 = vmatprep.subr.mxu0 0.0
        %1208 = vmatpush1.xpose.msra.mxu0 0.0
        %1209 = vmatprep.subr.mxu0 0.0
        %1210 = vmatpush1.xpose.msra.mxu0 0.0
        %1211 = vmatprep.subr.mxu0 0.0
        %1212 = vmatpush1.xpose.msra.mxu0 0.0
        %1213 = vmatprep.subr.mxu0 0.0
        %1214 = vmatpush1.xpose.msra.mxu0 0.0
        %1215 = vmatprep.subr.mxu0 0.0
        %1216 = vmatpush1.xpose.msra.mxu0 0.0
        %1217 = vmatprep.subr.mxu0 0.0
        %1218 = vmatpush1.xpose.msra.mxu0 0.0
        %1219 = vmatprep.subr.mxu0 0.0
        %1220 = vmatpush1.xpose.msra.mxu0 0.0
        %1221 = vmatprep.mubr.f32.mxu0 0.0
        %1222 = vmatmul.mubr.f32.gmra.mrb[0].mxu0 %v1153
        %v1223 = vpop.f32.mrb[0].mxu0
        %v1224 = vadd.f32 0.0, %v1223
        %v1225 = vpop.f32.mrb[0].mxu0
        %1226 = vdwg.mxu0
        %v1227 = vsel %vm654, %v1224, -inf
        %1228 = vmax.xlane.f32.xlu0 %v1227
        %v1229 = vpop.xlane.xlu0 %1228
        %v1230 = vsub.f32 %v1224, %v1229
        %v1231 = vmul.f32 %v1230, 1.442695
        %v1232 = vpow.pop %v1231
        %v1233 = vsel %vm654, %v1232, 0.0
        %1234 = vadd.xlane.f32.xlu0 %v1233
        %v1235 = vpop.xlane.xlu0 %1234
        %v1236 = vrcp.pop %v1235
        %v1237 = vmul.f32 1.0, %v1236
        %1238 = vrot.lane.b32.xlu0 %v651, 104
        %v1239 = vpop.permute.xlu0 %1238
        %v1242 = vsel %vm654, %v1232, 0
        %1244 = vmatprep.subr.mxu0 0.0
        %1245 = vmatpush1.msra.mxu0 %v1239
        %1246 = vmatprep.subr.mxu0 0.0
        %1247 = vmatpush1.msra.mxu0 0.0
        %1248 = vmatprep.subr.mxu0 0.0
        %1249 = vmatpush1.msra.mxu0 0.0
        %1250 = vmatprep.subr.mxu0 0.0
        %1251 = vmatpush1.msra.mxu0 0.0
        %1252 = vmatprep.subr.mxu0 0.0
        %1253 = vmatpush1.msra.mxu0 0.0
        %1254 = vmatprep.subr.mxu0 0.0
        %1255 = vmatpush1.msra.mxu0 0.0
        %1256 = vmatprep.subr.mxu0 0.0
        %1257 = vmatpush1.msra.mxu0 0.0
        %1258 = vmatprep.subr.mxu0 0.0
        %1259 = vmatpush1.msra.mxu0 0.0
        %1260 = vmatprep.subr.mxu0 0.0
        %1261 = vmatpush1.msra.mxu0 0.0
        %1262 = vmatprep.subr.mxu0 0.0
        %1263 = vmatpush1.msra.mxu0 0.0
        %1264 = vmatprep.subr.mxu0 0.0
        %1265 = vmatpush1.msra.mxu0 0.0
        %1266 = vmatprep.subr.mxu0 0.0
        %1267 = vmatpush1.msra.mxu0 0.0
        %1268 = vmatprep.subr.mxu0 0.0
        %1269 = vmatpush1.msra.mxu0 0.0
        %1270 = vmatprep.subr.mxu0 0.0
        %1271 = vmatpush1.msra.mxu0 0.0
        %1272 = vmatprep.subr.mxu0 0.0
        %1273 = vmatpush1.msra.mxu0 0.0
        %1274 = vmatprep.subr.mxu0 0.0
        %1275 = vmatpush1.msra.mxu0 0.0
        %1276 = vmatprep.subr.mxu0 0.0
        %1277 = vmatpush1.msra.mxu0 0.0
        %1278 = vmatprep.subr.mxu0 0.0
        %1279 = vmatpush1.msra.mxu0 0.0
        %1280 = vmatprep.subr.mxu0 0.0
        %1281 = vmatpush1.msra.mxu0 0.0
        %1282 = vmatprep.subr.mxu0 0.0
        %1283 = vmatpush1.msra.mxu0 0.0
        %1284 = vmatprep.subr.mxu0 0.0
        %1285 = vmatpush1.msra.mxu0 0.0
        %1286 = vmatprep.subr.mxu0 0.0
        %1287 = vmatpush1.msra.mxu0 0.0
        %1288 = vmatprep.subr.mxu0 0.0
        %1289 = vmatpush1.msra.mxu0 0.0
        %1290 = vmatprep.subr.mxu0 0.0
        %1291 = vmatpush1.msra.mxu0 0.0
        %1292 = vmatprep.subr.mxu0 0.0
        %1293 = vmatpush1.msra.mxu0 0.0
        %1294 = vmatprep.subr.mxu0 0.0
        %1295 = vmatpush1.msra.mxu0 0.0
        %1296 = vmatprep.subr.mxu0 0.0
        %1297 = vmatpush1.msra.mxu0 0.0
        %1298 = vmatprep.subr.mxu0 0.0
        %1299 = vmatpush1.msra.mxu0 0.0
        %1300 = vmatprep.subr.mxu0 0.0
        %1301 = vmatpush1.msra.mxu0 0.0
        %1302 = vmatprep.subr.mxu0 0.0
        %1303 = vmatpush1.msra.mxu0 0.0
        %1304 = vmatprep.subr.mxu0 0.0
        %1305 = vmatpush1.msra.mxu0 0.0
        %1306 = vmatprep.subr.mxu0 0.0
        %1307 = vmatpush1.msra.mxu0 0.0
        %1308 = vmatprep.mubr.f32.mxu0 0.0
        %1309 = vmatmul.mubr.f32.gmra.mrb[0].mxu0 %v1242
        %v1310 = vpop.f32.mrb[0].mxu0
        %v1311 = vadd.f32 0.0, %v1310
        %v1312 = vpop.f32.mrb[0].mxu0
        %1313 = vdwg.mxu0
        %v1314 = vmul.f32 %v1311, %v1237
        %1316 = vrot.lane.b32.xlu0 %v982, 8
        %v1317 = vpop.permute.xlu0 %1316
        %1320 = vrot.lane.b32.xlu0 %v1148, 16
        %v1321 = vpop.permute.xlu0 %1320
        %1324 = vrot.lane.b32.xlu0 %v1314, 24
        %v1325 = vpop.permute.xlu0 %1324
        %v1327 = vsel %vm654, %v815, %v1317
        %vm1328 = vcmask 130048
        %v1329 = vsel %vm1328, %v1327, %v1321
        %vm1330 = vcmask 195584
        %v1331 = vsel %vm1330, %v1329, %v1325
        %v1332 = vld [vmem:[#allocation10] sm:$0xff]
        %v1333 = vld [vmem:[#allocation10 + $0x8] sm:$0xff]
        %v1334 = vld [vmem:[#allocation10 + $0x10] sm:$0xff]
        %v1335 = vld [vmem:[#allocation10 + $0x18] sm:$0xff]
        %v1336 = vld [vmem:[%s8] sm:$0x1]
        %v1338 = vlaneseq
        %v1339 = vshrl.u32 %v1338, 7
        %v1340 = vsub.s32 0, %v1339
        %v1341 = vrot.slane %v1336, %v1340
        %v1344 = vsel %vm418, %v1331, 0
        %1346 = vmatprep.subr.mxu0 0.0
        %1347 = vmatpush1.msra.mxu0 %v1332
        %1348 = vmatprep.subr.mxu0 0.0
        %1349 = vmatpush1.msra.mxu0 %v1333
        %1350 = vmatprep.subr.mxu0 0.0
        %1351 = vmatpush1.msra.mxu0 %v1334
        %1352 = vmatprep.subr.mxu0 0.0
        %1353 = vmatpush1.msra.mxu0 %v1335
        %1354 = vmatprep.subr.mxu0 0.0
        %1355 = vmatpush1.msra.mxu0 0.0
        %1356 = vmatprep.subr.mxu0 0.0
        %1357 = vmatpush1.msra.mxu0 0.0
        %1358 = vmatprep.subr.mxu0 0.0
        %1359 = vmatpush1.msra.mxu0 0.0
        %1360 = vmatprep.subr.mxu0 0.0
        %1361 = vmatpush1.msra.mxu0 0.0
        %1362 = vmatprep.subr.mxu0 0.0
        %1363 = vmatpush1.msra.mxu0 0.0
        %1364 = vmatprep.subr.mxu0 0.0
        %1365 = vmatpush1.msra.mxu0 0.0
        %1366 = vmatprep.subr.mxu0 0.0
        %1367 = vmatpush1.msra.mxu0 0.0
        %1368 = vmatprep.subr.mxu0 0.0
        %1369 = vmatpush1.msra.mxu0 0.0
        %1370 = vmatprep.subr.mxu0 0.0
        %1371 = vmatpush1.msra.mxu0 0.0
        %1372 = vmatprep.subr.mxu0 0.0
        %1373 = vmatpush1.msra.mxu0 0.0
        %1374 = vmatprep.subr.mxu0 0.0
        %1375 = vmatpush1.msra.mxu0 0.0
        %1376 = vmatprep.subr.mxu0 0.0
        %1377 = vmatpush1.msra.mxu0 0.0
        %1378 = vmatprep.subr.mxu0 0.0
        %1379 = vmatpush1.msra.mxu0 0.0
        %1380 = vmatprep.subr.mxu0 0.0
        %1381 = vmatpush1.msra.mxu0 0.0
        %1382 = vmatprep.subr.mxu0 0.0
        %1383 = vmatpush1.msra.mxu0 0.0
        %1384 = vmatprep.subr.mxu0 0.0
        %1385 = vmatpush1.msra.mxu0 0.0
        %1386 = vmatprep.subr.mxu0 0.0
        %1387 = vmatpush1.msra.mxu0 0.0
        %1388 = vmatprep.subr.mxu0 0.0
        %1389 = vmatpush1.msra.mxu0 0.0
        %1390 = vmatprep.subr.mxu0 0.0
        %1391 = vmatpush1.msra.mxu0 0.0
        %1392 = vmatprep.subr.mxu0 0.0
        %1393 = vmatpush1.msra.mxu0 0.0
        %1394 = vmatprep.subr.mxu0 0.0
        %1395 = vmatpush1.msra.mxu0 0.0
        %1396 = vmatprep.subr.mxu0 0.0
        %1397 = vmatpush1.msra.mxu0 0.0
        %1398 = vmatprep.subr.mxu0 0.0
        %1399 = vmatpush1.msra.mxu0 0.0
        %1400 = vmatprep.subr.mxu0 0.0
        %1401 = vmatpush1.msra.mxu0 0.0
        %1402 = vmatprep.subr.mxu0 0.0
        %1403 = vmatpush1.msra.mxu0 0.0
        %1404 = vmatprep.subr.mxu0 0.0
        %1405 = vmatpush1.msra.mxu0 0.0
        %1406 = vmatprep.subr.mxu0 0.0
        %1407 = vmatpush1.msra.mxu0 0.0
        %1408 = vmatprep.subr.mxu0 0.0
        %1409 = vmatpush1.msra.mxu0 0.0
        %1410 = vmatprep.mubr.f32.mxu0 0.0
        %1411 = vmatmul.mubr.f32.gmra.mrb[0].mxu0 %v1344
        %v1412 = vpop.f32.mrb[0].mxu0
        %v1413 = vadd.f32 %v1341, %v1412
        %v1414 = vpop.f32.mrb[0].mxu0
        %1415 = vdwg.mxu0
        %1416 = vst.msk [vmem:[%s405] sm:$0xff] %vm418, %v1413
        %s1417 = sand.u32 %s230, 1
        %s1418 = scalar_lea.sflag [#allocation4], %s1417
        %s1419 = sand.u32 %s230, 1
        %s1420 = smul.addr %s1419, 8
        %s1421 = scalar_lea.vmem [#allocation11], %s1420
        // Predicated region
        $region77: #{tpu_custom_call.1} parent=55 // pred_check
          %p1422 = pneg %p240
        $region78: #{tpu_custom_call.1} parent=55 // pred_check_branch
          %1424 = sbr.rel (%p1422) target = $region80
        $region79: #{tpu_custom_call.1} parent=55 // pred_region
          %s1426 = ssub.s32 128, 128
          %1427 = vsyncadd %s1418, %s1426
          %s1428 = smul.addr %s28, 128
          %s1429 = scalar_lea.hbm %s9, %s1428
          %s1431 = sshll.u32 %s1421, 4
          %s1432 = int_to_ptr.vmem [resolvable:$true] %s1431
          %1434 = dma.vmem_to_hbm [thread:$0]  %s1432, 128, %s1429, %s1418
        $region80: #{tpu_custom_call.1} parent=55 // pred_fallthru
          _
      $region56: #{tpu_custom_call.1} parent=5 // pred_fallthru
        _
      %p1435 = scmp.le.s32.totalorder 2, %s23
      // Predicated region
      $region81: #{tpu_custom_call.1} parent=5 // pred_check
        %p1436 = pneg %p1435
      $region82: #{tpu_custom_call.1} parent=5 // pred_check_branch
        %1438 = sbr.rel (%p1436) target = $region84
      $region83: #{tpu_custom_call.1} parent=5 // pred_region
        %s1439 = ssub.s32 %s23, 2
        // Predicated region
        $region85: #{tpu_custom_call.1} parent=83 // pred_check
          %p1440 = pneg %p246
        $region86: #{tpu_custom_call.1} parent=83 // pred_check_branch
          %1442 = sbr.rel (%p1440) target = $region88
        $region87: #{tpu_custom_call.1} parent=83 // pred_region
          %s1443 = sand.u32 %s231, 1
          %s1444 = scalar_lea.sflag [#allocation4], %s1443
          %s1445 = sand.u32 %s231, 1
          %s1446 = smul.addr %s1445, 8
          %s1447 = scalar_lea.vmem [#allocation11], %s1446
          %1448 = dma.done %s1444, 128
        $region88: #{tpu_custom_call.1} parent=83 // pred_fallthru
          _
      $region84: #{tpu_custom_call.1} parent=5 // pred_fallthru
        _
    $region6: #{tpu_custom_call.1} parent=1 // loop_footer
      %s27 = sadd.s32 1, %s23
    $region7: #{tpu_custom_call.1} parent=1 // loop_footer_branch
      %22 = sbr.rel target = $region3
    $region8: #{tpu_custom_call.1} parent=1 // loop_exit
      _
    %1449 = vsyncpa [#allocation3], 1
    %s1450 = scalar_lea.sflag [#allocation3], 1
    %1451 = vsyncpa %s1450, 1
    %1452 = vsyncpa [#allocation6], 1
    %1453 = vsyncpa [#allocation9], 1
    %1454 = vsyncpa [#allocation4], 1
    %s1455 = scalar_lea.sflag [#allocation4], 1
    %1456 = vsyncpa %s1455, 1

</llo_original>
